<compile_context>
chip_gen: v6e
topology: v6e:2x2x1
jax: 0.10.0
libtpu: 0.0.40
codegen_flags: <defaults>
</compile_context>

<pallas_src>
import functools

import jax
import jax.numpy as jnp
from jax import lax
from jax.experimental import pallas as pl
from jax.experimental.pallas import tpu as pltpu


def _conv_bn_relu_kernel(x_ref, w_ref, bias_ref, o_ref, *, th, w_out, kh, kw):
    """One (batch, row-tile) step.

    x_ref:    (1, Hp, Wp, C_in)        bf16, padded input, resident per batch
    w_ref:    (kh*kw, C_in, C_pad)     bf16, BN-scale-folded weights, resident
    bias_ref: (1, C_pad)               f32, folded BN bias, resident
    o_ref:    (1, th*w_out, C_pad)     output tile (lane-dense, unmasked stores)
    """
    t = pl.program_id(1)
    h0 = pl.multiple_of(t * th, th)            # first output row of this tile
    c_in = x_ref.shape[-1]
    c_pad = o_ref.shape[-1]
    m = th * w_out

    acc = jnp.zeros((m, c_pad), jnp.float32)
    # Shifted-window conv: accumulate kh*kw small matmuls (K = C_in) on the MXU.
    for i in range(kh):
        for j in range(kw):
            win = x_ref[0, pl.ds(h0 + i, th), pl.ds(j, w_out), :]   # (th, w_out, C_in)
            lhs = win.reshape(m, c_in)                              # merge leading dims
            acc = acc + jnp.dot(lhs, w_ref[i * kw + j],
                                preferred_element_type=jnp.float32)

    # Folded BN bias + ReLU, in f32 (v5e has no bf16 VPU).
    y = jnp.maximum(acc + bias_ref[...], 0.0)
    o_ref[...] = y[None].astype(o_ref.dtype)


@functools.partial(jax.jit, static_argnames=("kh", "kw", "pad", "th", "eps"))
def basic_conv2d(x, weight, gamma, beta, running_mean, running_var,
                 *, kh, kw, pad, th=8, eps=1e-3):
    """x: (N, C_in, H, W) NCHW; weight: (C_out, C_in, kh, kw) (PyTorch layout)."""
    n, c_in, h, w = x.shape
    c_out = weight.shape[0]
    h_out = h + 2 * pad - kh + 1
    w_out = w + 2 * pad - kw + 1
    hp, wp = h + 2 * pad, w + 2 * pad
    c_pad = ((c_out + 127) // 128) * 128       # lane-dense output channels

    assert h_out % th == 0, "pick th dividing H_out (ragged tiles not implemented)"
    assert (th * w_out) % 8 == 0, "row tile must be sublane-aligned"

    # NHWC + spatial zero-pad; bf16 matmul operand (f32 accumulate in the kernel).
    xp = jnp.pad(x.transpose(0, 2, 3, 1),
                 ((0, 0), (pad, pad), (pad, pad), (0, 0))).astype(jnp.bfloat16)

    # Fold eval-mode BN into the conv: conv(x, W) * s == conv(x, W * s).
    scale = gamma / jnp.sqrt(running_var + eps)                    # (C_out,)
    bias = beta - running_mean * scale                             # (C_out,)
    w_folded = weight * scale[:, None, None, None]                 # f32 fold, then cast
    # (C_out, C_in, kh, kw) -> (kh*kw, C_in, C_out), pad C_out -> c_pad, bf16.
    w_mat = w_folded.transpose(2, 3, 1, 0).reshape(kh * kw, c_in, c_out)
    w_mat = jnp.pad(w_mat, ((0, 0), (0, 0), (0, c_pad - c_out))).astype(jnp.bfloat16)
    bias_pad = jnp.pad(bias, (0, c_pad - c_out)).reshape(1, c_pad).astype(jnp.float32)

    kernel = functools.partial(_conv_bn_relu_kernel, th=th, w_out=w_out, kh=kh, kw=kw)

    out_flat = pl.pallas_call(
        kernel,
        out_shape=jax.ShapeDtypeStruct((n, h_out * w_out, c_pad), x.dtype),
        grid_spec=pltpu.PrefetchScalarGridSpec(
            num_scalar_prefetch=0,
            grid=(n, h_out // th),
            in_specs=[
                # Padded input, one batch per block; constant along t -> resident,
                # HBM read stays ~1x the input size (no im2col inflation).
                pl.BlockSpec((1, hp, wp, c_in), lambda b, t: (b, 0, 0, 0)),
                # Folded weights + bias: resident across the whole grid.
                pl.BlockSpec((kh * kw, c_in, c_pad), lambda b, t: (0, 0, 0)),
                pl.BlockSpec((1, c_pad), lambda b, t: (0, 0)),
            ],
            out_specs=pl.BlockSpec((1, th * w_out, c_pad), lambda b, t: (b, t, 0)),
        ),
        compiler_params=pltpu.CompilerParams(
            dimension_semantics=("parallel", "parallel"),   # v7x: shard over both TCs
            vmem_limit_bytes=32 * 1024 * 1024),
    )(xp, w_mat, bias_pad)

    # Strip channel padding and go back to NCHW (external PyTorch contract).
    out = out_flat[:, :, :c_out].reshape(n, h_out, w_out, c_out).transpose(0, 3, 1, 2)
    return out


def _reference_f32(x, weight, gamma, beta, running_mean, running_var, pad, eps=1e-3):
    conv = lax.conv_general_dilated(
        x, weight, window_strides=(1, 1), padding=[(pad, pad), (pad, pad)],
        dimension_numbers=("NCHW", "OIHW", "NCHW"))
    scale = (gamma / jnp.sqrt(running_var + eps))[None, :, None, None]
    shift = (beta - running_mean * gamma / jnp.sqrt(running_var + eps))[None, :, None, None]
    return jnp.maximum(conv * scale + shift, 0.0)


def _reference_matched(x, weight, gamma, beta, running_mean, running_var, pad, eps=1e-3):
    """Same math as the kernel (scale-folded bf16 operands, f32 accumulate)."""
    scale = gamma / jnp.sqrt(running_var + eps)
    w_f = (weight * scale[:, None, None, None]).astype(jnp.bfloat16)
    conv = lax.conv_general_dilated(
        x.astype(jnp.bfloat16), w_f, window_strides=(1, 1),
        padding=[(pad, pad), (pad, pad)],
        dimension_numbers=("NCHW", "OIHW", "NCHW"),
        preferred_element_type=jnp.float32)
    bias = (beta - running_mean * scale)[None, :, None, None]
    return jnp.maximum(conv + bias, 0.0)


if __name__ == "__main__":
    key = jax.random.PRNGKey(0)
    k_x, k_w, k_g, k_b = jax.random.split(key, 4)

    N, C_IN, H, W = 2, 4, 16, 16
    C_OUT, KH, KW, PAD = 8, 3, 3, 1

    x = jax.random.normal(k_x, (N, C_IN, H, W), dtype=jnp.float32)
    weight = jax.random.normal(k_w, (C_OUT, C_IN, KH, KW), dtype=jnp.float32) * 0.1
    gamma = jax.random.uniform(k_g, (C_OUT,), dtype=jnp.float32, minval=0.5, maxval=1.5)
    beta = jax.random.normal(k_b, (C_OUT,), dtype=jnp.float32) * 0.1
    running_mean = jnp.zeros((C_OUT,), jnp.float32)   # PyTorch BN init
    running_var = jnp.ones((C_OUT,), jnp.float32)     # PyTorch BN init

    out = basic_conv2d(x, weight, gamma, beta, running_mean, running_var,
                       kh=KH, kw=KW, pad=PAD, th=8)
    out = jax.block_until_ready(out)
    assert out.shape == (N, C_OUT, H, W)

    # Tight check vs a reference computed with matching (bf16-operand) precision.
    ref_m = _reference_matched(x, weight, gamma, beta, running_mean, running_var, PAD)
    assert jnp.allclose(out, ref_m, atol=1e-3, rtol=1e-3), "mismatch vs matched reference"

    # Loose sanity check vs the full-f32 reference (bf16 operand rounding allowed).
    ref_f = _reference_f32(x, weight, gamma, beta, running_mean, running_var, PAD)
    assert jnp.allclose(out, ref_f, atol=5e-2, rtol=5e-2), "mismatch vs f32 reference"

    print("KERNEL_OK")
</pallas_src>

<mosaic_0001>
module attributes {stable_mosaic.version = 11 : i64} {
  func.func @_conv_bn_relu_kernel(%arg0: i32, %arg1: i32, %arg2: memref<1x18x18x4xbf16, #tpu.memory_space<vmem>>, %arg3: memref<9x4x128xbf16, #tpu.memory_space<vmem>>, %arg4: memref<1x128xf32, #tpu.memory_space<vmem>>, %arg5: memref<1x128x128xf32, #tpu.memory_space<vmem>>) attributes {dimension_semantics = [#tpu.dimension_semantics<parallel>, #tpu.dimension_semantics<parallel>], iteration_bounds = array<i64: 2, 2>, scalar_prefetch = 0 : i64, scratch_operands = 0 : i64, tpu.core_type = #tpu.core_type<tc>, window_params = [{transform_indices = @transform_0, window_bounds = array<i64: 1, 18, 18, 4>}, {pipeline_mode = #tpu.pipeline_mode<synchronous>, transform_indices = @transform_1, window_bounds = array<i64: 9, 4, 128>}, {pipeline_mode = #tpu.pipeline_mode<synchronous>, transform_indices = @transform_2, window_bounds = array<i64: 1, 128>}, {transform_indices = @transform_3, window_bounds = array<i64: 1, 128, 128>}]} {
    %c8_i32 = arith.constant 8 : i32
    %0 = arith.muli %arg1, %c8_i32 : i32
    %1 = tpu.assume_multiple %0, 8 : i32
    %cst = arith.constant 0.000000e+00 : f32
    %2 = vector.broadcast %cst : f32 to vector<128x128xf32>
    %c0_i32 = arith.constant 0 : i32
    %3 = arith.addi %1, %c0_i32 : i32
    %c0 = arith.constant 0 : index
    %4 = arith.index_cast %3 : i32 to index
    %c0_0 = arith.constant 0 : index
    %c0_1 = arith.constant 0 : index
    %5 = vector.load %arg2[%c0, %4, %c0_0, %c0_1] : memref<1x18x18x4xbf16, #tpu.memory_space<vmem>>, vector<1x8x16x4xbf16>
    %6 = vector.shape_cast %5 : vector<1x8x16x4xbf16> to vector<8x16x4xbf16>
    %7 = vector.shape_cast %6 : vector<8x16x4xbf16> to vector<128x4xbf16>
    %c0_2 = arith.constant 0 : index
    %c0_3 = arith.constant 0 : index
    %c0_4 = arith.constant 0 : index
    %8 = vector.load %arg3[%c0_2, %c0_3, %c0_4] : memref<9x4x128xbf16, #tpu.memory_space<vmem>>, vector<1x4x128xbf16>
    %9 = vector.shape_cast %8 : vector<1x4x128xbf16> to vector<4x128xbf16>
    %cst_5 = arith.constant dense<0.000000e+00> : vector<128x128xf32>
    %10 = tpu.matmul %7, %9, %cst_5 {dimension_numbers = #tpu.dot_dimension_numbers<[1], [0], [0], [1], [0, 0, 1, 1], [], []>} : vector<128x4xbf16>, vector<4x128xbf16>, vector<128x128xf32> -> vector<128x128xf32>
    %11 = arith.addf %2, %10 : vector<128x128xf32>
    %c0_i32_6 = arith.constant 0 : i32
    %12 = arith.addi %1, %c0_i32_6 : i32
    %c0_7 = arith.constant 0 : index
    %13 = arith.index_cast %12 : i32 to index
    %c1 = arith.constant 1 : index
    %c0_8 = arith.constant 0 : index
    %14 = vector.load %arg2[%c0_7, %13, %c1, %c0_8] : memref<1x18x18x4xbf16, #tpu.memory_space<vmem>>, vector<1x8x16x4xbf16>
    %15 = vector.shape_cast %14 : vector<1x8x16x4xbf16> to vector<8x16x4xbf16>
    %16 = vector.shape_cast %15 : vector<8x16x4xbf16> to vector<128x4xbf16>
    %c1_9 = arith.constant 1 : index
    %c0_10 = arith.constant 0 : index
    %c0_11 = arith.constant 0 : index
    %17 = vector.load %arg3[%c1_9, %c0_10, %c0_11] : memref<9x4x128xbf16, #tpu.memory_space<vmem>>, vector<1x4x128xbf16>
    %18 = vector.shape_cast %17 : vector<1x4x128xbf16> to vector<4x128xbf16>
    %cst_12 = arith.constant dense<0.000000e+00> : vector<128x128xf32>
    %19 = tpu.matmul %16, %18, %cst_12 {dimension_numbers = #tpu.dot_dimension_numbers<[1], [0], [0], [1], [0, 0, 1, 1], [], []>} : vector<128x4xbf16>, vector<4x128xbf16>, vector<128x128xf32> -> vector<128x128xf32>
    %20 = arith.addf %11, %19 : vector<128x128xf32>
    %c0_i32_13 = arith.constant 0 : i32
    %21 = arith.addi %1, %c0_i32_13 : i32
    %c0_14 = arith.constant 0 : index
    %22 = arith.index_cast %21 : i32 to index
    %c2 = arith.constant 2 : index
    %c0_15 = arith.constant 0 : index
    %23 = vector.load %arg2[%c0_14, %22, %c2, %c0_15] : memref<1x18x18x4xbf16, #tpu.memory_space<vmem>>, vector<1x8x16x4xbf16>
    %24 = vector.shape_cast %23 : vector<1x8x16x4xbf16> to vector<8x16x4xbf16>
    %25 = vector.shape_cast %24 : vector<8x16x4xbf16> to vector<128x4xbf16>
    %c2_16 = arith.constant 2 : index
    %c0_17 = arith.constant 0 : index
    %c0_18 = arith.constant 0 : index
    %26 = vector.load %arg3[%c2_16, %c0_17, %c0_18] : memref<9x4x128xbf16, #tpu.memory_space<vmem>>, vector<1x4x128xbf16>
    %27 = vector.shape_cast %26 : vector<1x4x128xbf16> to vector<4x128xbf16>
    %cst_19 = arith.constant dense<0.000000e+00> : vector<128x128xf32>
    %28 = tpu.matmul %25, %27, %cst_19 {dimension_numbers = #tpu.dot_dimension_numbers<[1], [0], [0], [1], [0, 0, 1, 1], [], []>} : vector<128x4xbf16>, vector<4x128xbf16>, vector<128x128xf32> -> vector<128x128xf32>
    %29 = arith.addf %20, %28 : vector<128x128xf32>
    %c1_i32 = arith.constant 1 : i32
    %30 = arith.addi %1, %c1_i32 : i32
    %c0_20 = arith.constant 0 : index
    %31 = arith.index_cast %30 : i32 to index
    %c0_21 = arith.constant 0 : index
    %c0_22 = arith.constant 0 : index
    %32 = vector.load %arg2[%c0_20, %31, %c0_21, %c0_22] : memref<1x18x18x4xbf16, #tpu.memory_space<vmem>>, vector<1x8x16x4xbf16>
    %33 = vector.shape_cast %32 : vector<1x8x16x4xbf16> to vector<8x16x4xbf16>
    %34 = vector.shape_cast %33 : vector<8x16x4xbf16> to vector<128x4xbf16>
    %c3 = arith.constant 3 : index
    %c0_23 = arith.constant 0 : index
    %c0_24 = arith.constant 0 : index
    %35 = vector.load %arg3[%c3, %c0_23, %c0_24] : memref<9x4x128xbf16, #tpu.memory_space<vmem>>, vector<1x4x128xbf16>
    %36 = vector.shape_cast %35 : vector<1x4x128xbf16> to vector<4x128xbf16>
    %cst_25 = arith.constant dense<0.000000e+00> : vector<128x128xf32>
    %37 = tpu.matmul %34, %36, %cst_25 {dimension_numbers = #tpu.dot_dimension_numbers<[1], [0], [0], [1], [0, 0, 1, 1], [], []>} : vector<128x4xbf16>, vector<4x128xbf16>, vector<128x128xf32> -> vector<128x128xf32>
    %38 = arith.addf %29, %37 : vector<128x128xf32>
    %c1_i32_26 = arith.constant 1 : i32
    %39 = arith.addi %1, %c1_i32_26 : i32
    %c0_27 = arith.constant 0 : index
    %40 = arith.index_cast %39 : i32 to index
    %c1_28 = arith.constant 1 : index
    %c0_29 = arith.constant 0 : index
    %41 = vector.load %arg2[%c0_27, %40, %c1_28, %c0_29] : memref<1x18x18x4xbf16, #tpu.memory_space<vmem>>, vector<1x8x16x4xbf16>
    %42 = vector.shape_cast %41 : vector<1x8x16x4xbf16> to vector<8x16x4xbf16>
    %43 = vector.shape_cast %42 : vector<8x16x4xbf16> to vector<128x4xbf16>
    %c4 = arith.constant 4 : index
    %c0_30 = arith.constant 0 : index
    %c0_31 = arith.constant 0 : index
    %44 = vector.load %arg3[%c4, %c0_30, %c0_31] : memref<9x4x128xbf16, #tpu.memory_space<vmem>>, vector<1x4x128xbf16>
    %45 = vector.shape_cast %44 : vector<1x4x128xbf16> to vector<4x128xbf16>
    %cst_32 = arith.constant dense<0.000000e+00> : vector<128x128xf32>
    %46 = tpu.matmul %43, %45, %cst_32 {dimension_numbers = #tpu.dot_dimension_numbers<[1], [0], [0], [1], [0, 0, 1, 1], [], []>} : vector<128x4xbf16>, vector<4x128xbf16>, vector<128x128xf32> -> vector<128x128xf32>
    %47 = arith.addf %38, %46 : vector<128x128xf32>
    %c1_i32_33 = arith.constant 1 : i32
    %48 = arith.addi %1, %c1_i32_33 : i32
    %c0_34 = arith.constant 0 : index
    %49 = arith.index_cast %48 : i32 to index
    %c2_35 = arith.constant 2 : index
    %c0_36 = arith.constant 0 : index
    %50 = vector.load %arg2[%c0_34, %49, %c2_35, %c0_36] : memref<1x18x18x4xbf16, #tpu.memory_space<vmem>>, vector<1x8x16x4xbf16>
    %51 = vector.shape_cast %50 : vector<1x8x16x4xbf16> to vector<8x16x4xbf16>
    %52 = vector.shape_cast %51 : vector<8x16x4xbf16> to vector<128x4xbf16>
    %c5 = arith.constant 5 : index
    %c0_37 = arith.constant 0 : index
    %c0_38 = arith.constant 0 : index
    %53 = vector.load %arg3[%c5, %c0_37, %c0_38] : memref<9x4x128xbf16, #tpu.memory_space<vmem>>, vector<1x4x128xbf16>
    %54 = vector.shape_cast %53 : vector<1x4x128xbf16> to vector<4x128xbf16>
    %cst_39 = arith.constant dense<0.000000e+00> : vector<128x128xf32>
    %55 = tpu.matmul %52, %54, %cst_39 {dimension_numbers = #tpu.dot_dimension_numbers<[1], [0], [0], [1], [0, 0, 1, 1], [], []>} : vector<128x4xbf16>, vector<4x128xbf16>, vector<128x128xf32> -> vector<128x128xf32>
    %56 = arith.addf %47, %55 : vector<128x128xf32>
    %c2_i32 = arith.constant 2 : i32
    %57 = arith.addi %1, %c2_i32 : i32
    %c0_40 = arith.constant 0 : index
    %58 = arith.index_cast %57 : i32 to index
    %c0_41 = arith.constant 0 : index
    %c0_42 = arith.constant 0 : index
    %59 = vector.load %arg2[%c0_40, %58, %c0_41, %c0_42] : memref<1x18x18x4xbf16, #tpu.memory_space<vmem>>, vector<1x8x16x4xbf16>
    %60 = vector.shape_cast %59 : vector<1x8x16x4xbf16> to vector<8x16x4xbf16>
    %61 = vector.shape_cast %60 : vector<8x16x4xbf16> to vector<128x4xbf16>
    %c6 = arith.constant 6 : index
    %c0_43 = arith.constant 0 : index
    %c0_44 = arith.constant 0 : index
    %62 = vector.load %arg3[%c6, %c0_43, %c0_44] : memref<9x4x128xbf16, #tpu.memory_space<vmem>>, vector<1x4x128xbf16>
    %63 = vector.shape_cast %62 : vector<1x4x128xbf16> to vector<4x128xbf16>
    %cst_45 = arith.constant dense<0.000000e+00> : vector<128x128xf32>
    %64 = tpu.matmul %61, %63, %cst_45 {dimension_numbers = #tpu.dot_dimension_numbers<[1], [0], [0], [1], [0, 0, 1, 1], [], []>} : vector<128x4xbf16>, vector<4x128xbf16>, vector<128x128xf32> -> vector<128x128xf32>
    %65 = arith.addf %56, %64 : vector<128x128xf32>
    %c2_i32_46 = arith.constant 2 : i32
    %66 = arith.addi %1, %c2_i32_46 : i32
    %c0_47 = arith.constant 0 : index
    %67 = arith.index_cast %66 : i32 to index
    %c1_48 = arith.constant 1 : index
    %c0_49 = arith.constant 0 : index
    %68 = vector.load %arg2[%c0_47, %67, %c1_48, %c0_49] : memref<1x18x18x4xbf16, #tpu.memory_space<vmem>>, vector<1x8x16x4xbf16>
    %69 = vector.shape_cast %68 : vector<1x8x16x4xbf16> to vector<8x16x4xbf16>
    %70 = vector.shape_cast %69 : vector<8x16x4xbf16> to vector<128x4xbf16>
    %c7 = arith.constant 7 : index
    %c0_50 = arith.constant 0 : index
    %c0_51 = arith.constant 0 : index
    %71 = vector.load %arg3[%c7, %c0_50, %c0_51] : memref<9x4x128xbf16, #tpu.memory_space<vmem>>, vector<1x4x128xbf16>
    %72 = vector.shape_cast %71 : vector<1x4x128xbf16> to vector<4x128xbf16>
    %cst_52 = arith.constant dense<0.000000e+00> : vector<128x128xf32>
    %73 = tpu.matmul %70, %72, %cst_52 {dimension_numbers = #tpu.dot_dimension_numbers<[1], [0], [0], [1], [0, 0, 1, 1], [], []>} : vector<128x4xbf16>, vector<4x128xbf16>, vector<128x128xf32> -> vector<128x128xf32>
    %74 = arith.addf %65, %73 : vector<128x128xf32>
    %c2_i32_53 = arith.constant 2 : i32
    %75 = arith.addi %1, %c2_i32_53 : i32
    %c0_54 = arith.constant 0 : index
    %76 = arith.index_cast %75 : i32 to index
    %c2_55 = arith.constant 2 : index
    %c0_56 = arith.constant 0 : index
    %77 = vector.load %arg2[%c0_54, %76, %c2_55, %c0_56] : memref<1x18x18x4xbf16, #tpu.memory_space<vmem>>, vector<1x8x16x4xbf16>
    %78 = vector.shape_cast %77 : vector<1x8x16x4xbf16> to vector<8x16x4xbf16>
    %79 = vector.shape_cast %78 : vector<8x16x4xbf16> to vector<128x4xbf16>
    %c8 = arith.constant 8 : index
    %c0_57 = arith.constant 0 : index
    %c0_58 = arith.constant 0 : index
    %80 = vector.load %arg3[%c8, %c0_57, %c0_58] : memref<9x4x128xbf16, #tpu.memory_space<vmem>>, vector<1x4x128xbf16>
    %81 = vector.shape_cast %80 : vector<1x4x128xbf16> to vector<4x128xbf16>
    %cst_59 = arith.constant dense<0.000000e+00> : vector<128x128xf32>
    %82 = tpu.matmul %79, %81, %cst_59 {dimension_numbers = #tpu.dot_dimension_numbers<[1], [0], [0], [1], [0, 0, 1, 1], [], []>} : vector<128x4xbf16>, vector<4x128xbf16>, vector<128x128xf32> -> vector<128x128xf32>
    %83 = arith.addf %74, %82 : vector<128x128xf32>
    %c0_60 = arith.constant 0 : index
    %c0_61 = arith.constant 0 : index
    %84 = vector.load %arg4[%c0_60, %c0_61] : memref<1x128xf32, #tpu.memory_space<vmem>>, vector<1x128xf32>
    %85 = vector.broadcast %84 : vector<1x128xf32> to vector<128x128xf32>
    %86 = arith.addf %83, %85 : vector<128x128xf32>
    %cst_62 = arith.constant 0.000000e+00 : f32
    %87 = vector.broadcast %cst_62 : f32 to vector<128x128xf32>
    %88 = arith.maximumf %86, %87 : vector<128x128xf32>
    %89 = vector.shape_cast %88 : vector<128x128xf32> to vector<1x128x128xf32>
    %c0_63 = arith.constant 0 : index
    %c0_64 = arith.constant 0 : index
    %c0_65 = arith.constant 0 : index
    %90 = vector.load %arg5[%c0_63, %c0_64, %c0_65] : memref<1x128x128xf32, #tpu.memory_space<vmem>>, vector<1x128x128xf32>
    tpu.vector_store %arg5[%c0_63, %c0_64, %c0_65], %89 {strides = array<i32>} : memref<1x128x128xf32, #tpu.memory_space<vmem>>, vector<1x128x128xf32>,
    return
  }
  func.func @transform_0(%arg0: i32, %arg1: i32) -> (i32, i32, i32, i32) {
    %c0_i32 = arith.constant 0 : i32
    %c0_i32_0 = arith.constant 0 : i32
    %c0_i32_1 = arith.constant 0 : i32
    %c0_i32_2 = arith.constant 0 : i32
    return %arg0, %c0_i32, %c0_i32_0, %c0_i32_1 : i32, i32, i32, i32
  }
  func.func @transform_1(%arg0: i32, %arg1: i32) -> (i32, i32, i32) {
    %c0_i32 = arith.constant 0 : i32
    %c0_i32_0 = arith.constant 0 : i32
    %c0_i32_1 = arith.constant 0 : i32
    %c0_i32_2 = arith.constant 0 : i32
    return %c0_i32, %c0_i32_0, %c0_i32_1 : i32, i32, i32
  }
  func.func @transform_2(%arg0: i32, %arg1: i32) -> (i32, i32) {
    %c0_i32 = arith.constant 0 : i32
    %c0_i32_0 = arith.constant 0 : i32
    %c0_i32_1 = arith.constant 0 : i32
    return %c0_i32, %c0_i32_0 : i32, i32
  }
  func.func @transform_3(%arg0: i32, %arg1: i32) -> (i32, i32, i32) {
    %c0_i32 = arith.constant 0 : i32
    %c0_i32_0 = arith.constant 0 : i32
    return %arg0, %arg1, %c0_i32 : i32, i32, i32
  }
}

</mosaic_0001>

<llo_original>
// kernel: basic_conv2d.1
$region0: #{basic_conv2d.1}
  #allocation0 [shape = 'u32[]', space=smem, size = 0x4, offset = 0x4, fixed_abs, tag = 'smem constant byte address 0x4 - core index']
  #allocation1 [shape = 'u32[144,128]{1,0:T(1,128)}', space=vmem, size = 0x12000, scoped, tag = 'internal scratch']
  %s0 = inlined_call_operand.vmem [shape: bf16[2,18,18,4], index: 0, kind: input, shape index: {}]
  %s1 = inlined_call_operand.vmem [shape: bf16[9,4,128], index: 1, kind: input, shape index: {}]
  %s2 = inlined_call_operand.vmem [shape: f32[1,128], index: 2, kind: input, shape index: {}]
  %s3 = inlined_call_operand.vmem [shape: f32[2,256,128], index: 3, kind: output, shape index: {}]
  %s4 = sld [smem:[#allocation0]]
  $region45: #{basic_conv2d.1} parent=0
    _
  %s6 = ssub.s32 1, %s4
  %s7 = scalar_select 0, %s6, %s4
  loop: start=0, step=1, limit=6
  $region2: #{basic_conv2d.1} parent=0 // loop_pre_header
    _
  $region3: #{basic_conv2d.1} parent=0 // loop_header
    %s9 = sphi 0, %s13
    %p10 = scmp.ge.s32.totalorder %s9, 6
    %s16 = sphi 0, %s28
    %s17 = sphi 0, %s24
    %s18 = sphi 0, %s16
    %s19 = sphi 0, %s17
    %s20 = sphi 0, %s18
    %s21 = sphi 0, %s19
    %s31 = sphi 0, %s33
    %s34 = sphi 0, %s31
    %s35 = sphi 0, %s34
    %s51 = sphi 0, %s35
    %s55 = sphi 0, %s55
    %s57 = sphi 0, %s55
    %s58 = sphi 0, %s57
    %s72 = sphi 0, %s58
    %s76 = sphi 0, %s76
    %s78 = sphi 0, %s76
    %s79 = sphi 0, %s78
    %s93 = sphi 0, %s79
    %s101 = sphi 0, %s103
    %s104 = sphi 0, %s101
    %s105 = sphi 0, %s104
    %s121 = sphi 0, %s105
  $region4: #{basic_conv2d.1} parent=0 // loop_header_branch
    %12 = sbr.rel (%p10) target = $region8
  $region5: #{basic_conv2d.1} parent=0 // loop_body
    %s14 = ssub.s32 %s9, 1
    %s15 = ssub.s32 %s9, 2
    %s22 = sadd.s32 1, %s17
    %p23 = scmp.ge.s32.totalorder %s22, 2
    %s24 = scalar_select %p23, 0, %s22
    %s25 = sadd.s32 1, %s16
    %s26 = scalar_select %p23, %s25, %s16
    %p27 = scmp.ge.s32.totalorder %s26, 2
    %s28 = scalar_select %p27, 0, %s26
    %s29 = ssub.s32 %s16, %s28
    %p30 = scmp.eq.s32.totalorder %s29, 0
    %s32 = sadd.s32 %s31, 1
    %s33 = scalar_select %p30, %s31, %s32
    %p36 = pneg %p30
    %p37 = scmp.eq.s32.totalorder %s9, 3
    %p38 = por %p36, %p37
    %p39 = scmp.ne.s32.totalorder %s31, %s34
    %p40 = scmp.eq.s32.totalorder %s9, 0
    %p41 = por %p39, %p40
    %p42 = scmp.ne.s32.totalorder %s31, %s34
    %p43 = scmp.eq.s32.totalorder %s14, 3
    %p44 = por %p42, %p43
    %p45 = scmp.ne.s32.totalorder %s34, %s35
    %p46 = scmp.eq.s32.totalorder %s14, 0
    %p47 = por %p45, %p46
    %p48 = scmp.ne.s32.totalorder %s34, %s35
    %p49 = scmp.eq.s32.totalorder %s15, 3
    %p50 = por %p48, %p49
    %p52 = scmp.ne.s32.totalorder %s35, %s51
    %p53 = scmp.eq.s32.totalorder %s15, 0
    %p54 = por %p52, %p53
    %s56 = sadd.s32 %s55, 1
    %p59 = scmp.eq.s32.totalorder %s9, 3
    %p60 = scmp.ne.s32.totalorder %s55, %s57
    %p61 = scmp.eq.s32.totalorder %s9, 0
    %p62 = por %p60, %p61
    %p63 = scmp.ne.s32.totalorder %s55, %s57
    %p64 = scmp.eq.s32.totalorder %s14, 3
    %p65 = por %p63, %p64
    %p66 = scmp.ne.s32.totalorder %s57, %s58
    %p67 = scmp.eq.s32.totalorder %s14, 0
    %p68 = por %p66, %p67
    %p69 = scmp.ne.s32.totalorder %s57, %s58
    %p70 = scmp.eq.s32.totalorder %s15, 3
    %p71 = por %p69, %p70
    %p73 = scmp.ne.s32.totalorder %s58, %s72
    %p74 = scmp.eq.s32.totalorder %s15, 0
    %p75 = por %p73, %p74
    %s77 = sadd.s32 %s76, 1
    %p80 = scmp.eq.s32.totalorder %s9, 3
    %p81 = scmp.ne.s32.totalorder %s76, %s78
    %p82 = scmp.eq.s32.totalorder %s9, 0
    %p83 = por %p81, %p82
    %p84 = scmp.ne.s32.totalorder %s76, %s78
    %p85 = scmp.eq.s32.totalorder %s14, 3
    %p86 = por %p84, %p85
    %p87 = scmp.ne.s32.totalorder %s78, %s79
    %p88 = scmp.eq.s32.totalorder %s14, 0
    %p89 = por %p87, %p88
    %p90 = scmp.ne.s32.totalorder %s78, %s79
    %p91 = scmp.eq.s32.totalorder %s15, 3
    %p92 = por %p90, %p91
    %p94 = scmp.ne.s32.totalorder %s79, %s93
    %p95 = scmp.eq.s32.totalorder %s15, 0
    %p96 = por %p94, %p95
    %s97 = ssub.s32 %s16, %s28
    %s98 = ssub.s32 %s17, %s24
    %s99 = sor.u32 %s97, %s98
    %p100 = scmp.eq.s32.totalorder %s99, 0
    %s102 = sadd.s32 %s101, 1
    %s103 = scalar_select %p100, %s101, %s102
    %p106 = pneg %p100
    %p107 = scmp.eq.s32.totalorder %s9, 3
    %p108 = por %p106, %p107
    %p109 = scmp.ne.s32.totalorder %s101, %s104
    %p110 = scmp.eq.s32.totalorder %s9, 0
    %p111 = por %p109, %p110
    %p112 = scmp.ne.s32.totalorder %s101, %s104
    %p113 = scmp.eq.s32.totalorder %s14, 3
    %p114 = por %p112, %p113
    %p115 = scmp.ne.s32.totalorder %s104, %s105
    %p116 = scmp.eq.s32.totalorder %s14, 0
    %p117 = por %p115, %p116
    %p118 = scmp.ne.s32.totalorder %s104, %s105
    %p119 = scmp.eq.s32.totalorder %s15, 3
    %p120 = por %p118, %p119
    %p122 = scmp.ne.s32.totalorder %s105, %s121
    %p123 = scmp.eq.s32.totalorder %s15, 0
    %p124 = por %p122, %p123
    %p125 = scmp.le.s32.totalorder 1, %s9
    %p126 = scmp.lt.s32.totalorder %s9, 5
    %p127 = pnand %p125, %p126
    %p128 = pneg %p127
    // Predicated region
    $region9: #{basic_conv2d.1} parent=5 // pred_check
      _
    $region10: #{basic_conv2d.1} parent=5 // pred_check_branch
      %130 = sbr.rel (%p127) target = $region12
    $region11: #{basic_conv2d.1} parent=5 // pred_region
      %s131 = ssub.s32 %s9, 1
      // Predicated region
      $region13: #{basic_conv2d.1} parent=11 // pred_check
        %p132 = pneg %p68
      $region14: #{basic_conv2d.1} parent=11 // pred_check_branch
        %134 = sbr.rel (%p132) target = $region16
      $region15: #{basic_conv2d.1} parent=11 // pred_region
        _
      $region16: #{basic_conv2d.1} parent=11 // pred_fallthru
        _
      // Predicated region
      $region17: #{basic_conv2d.1} parent=11 // pred_check
        %p135 = pneg %p89
      $region18: #{basic_conv2d.1} parent=11 // pred_check_branch
        %137 = sbr.rel (%p135) target = $region20
      $region19: #{basic_conv2d.1} parent=11 // pred_region
        _
      $region20: #{basic_conv2d.1} parent=11 // pred_fallthru
        _
    $region12: #{basic_conv2d.1} parent=5 // pred_fallthru
      _
    %p138 = scmp.lt.s32.totalorder %s9, 4
    // Predicated region
    $region21: #{basic_conv2d.1} parent=5 // pred_check
      %p139 = pneg %p138
    $region22: #{basic_conv2d.1} parent=5 // pred_check_branch
      %141 = sbr.rel (%p139) target = $region24
    $region23: #{basic_conv2d.1} parent=5 // pred_region
      // Predicated region
      $region25: #{basic_conv2d.1} parent=23 // pred_check
        %p142 = pneg %p41
      $region26: #{basic_conv2d.1} parent=23 // pred_check_branch
        %144 = sbr.rel (%p142) target = $region28
      $region27: #{basic_conv2d.1} parent=23 // pred_region
        %p145 = scmp.lt.s32.totalorder %s16, 1
        %s146 = scalar_select %p145, %s16, 1
        %s147 = smul.addr %s146, 54
        %s148 = smul.addr %s147, 4
        %s149 = scalar_lea.vmem %s0, %s148
      $region28: #{basic_conv2d.1} parent=23 // pred_fallthru
        _
    $region24: #{basic_conv2d.1} parent=5 // pred_fallthru
      _
    %p150 = scmp.le.s32.totalorder 1, %s9
    %p151 = scmp.lt.s32.totalorder %s9, 5
    %p152 = pnand %p150, %p151
    %p153 = pneg %p152
    // Predicated region
    $region29: #{basic_conv2d.1} parent=5 // pred_check
      _
    $region30: #{basic_conv2d.1} parent=5 // pred_check_branch
      %155 = sbr.rel (%p152) target = $region32
    $region31: #{basic_conv2d.1} parent=5 // pred_region
      %s156 = ssub.s32 %s9, 1
      %p157 = scmp.lt.s32.totalorder %s18, 1
      %s158 = scalar_select %p157, %s18, 1
      %s159 = smul.addr %s158, 54
      %s160 = smul.addr %s159, 4
      %s161 = scalar_lea.vmem %s0, %s160
      %p162 = pneg %p47
      %p163 = pneg %p44
      %p164 = pneg %p68
      %p165 = pneg %p65
      %p166 = pneg %p89
      %p167 = pneg %p86
      %p168 = pneg %p117
      %p169 = pneg %p114
      %s170 = smul.u32 16, %s19
      %p171 = scmp.lt.s32.totalorder %s18, 1
      %s172 = scalar_select %p171, %s18, 1
      %p173 = scmp.lt.s32.totalorder %s170, 31
      %s174 = scalar_select %p173, %s170, 31
      %s175 = smul.addr %s172, 32
      %s176 = sadd.s32 %s174, %s175
      %s177 = smul.addr %s176, 8
      %s178 = scalar_lea.vmem %s3, %s177
      %p179 = scmp.lt.s32.totalorder %s18, 1
      %s180 = scalar_select %p179, %s18, 1
      %s181 = smul.addr %s180, 54
      %s182 = smul.addr %s181, 4
      %s183 = scalar_lea.vmem %s0, %s182
      %s184 = smul.u32 16, %s19
      %p185 = scmp.lt.s32.totalorder %s18, 1
      %s186 = scalar_select %p185, %s18, 1
      %p187 = scmp.lt.s32.totalorder %s184, 31
      %s188 = scalar_select %p187, %s184, 31
      %s189 = smul.addr %s186, 32
      %s190 = sadd.s32 %s188, %s189
      %s191 = smul.addr %s190, 8
      %s192 = scalar_lea.vmem %s3, %s191
      %s193 = smul.u32 16, %s19
      %s195 = smul.u32 %s19, 8
      %s196 = smul.u32 %s195, 3
      %s197 = smul.addr %s196, 4
      %s198 = scalar_lea.vmem %s183, %s197
      %v199 = vld [vmem:[%s198] sm:$0xf]
      %v200 = vld [vmem:[%s198 + $0x4] sm:$0xf]
      %v201 = vld [vmem:[%s198 + $0xc] sm:$0xf]
      %v202 = vld [vmem:[%s198 + $0x10] sm:$0xf]
      %v203 = vld [vmem:[%s198 + $0x18] sm:$0xf]
      %v204 = vld [vmem:[%s198 + $0x1c] sm:$0xf]
      %v205 = vld [vmem:[%s198 + $0x24] sm:$0xf]
      %v206 = vld [vmem:[%s198 + $0x28] sm:$0xf]
      %v207 = vld [vmem:[%s198 + $0x30] sm:$0xf]
      %v208 = vld [vmem:[%s198 + $0x34] sm:$0xf]
      %v209 = vld [vmem:[%s198 + $0x3c] sm:$0xf]
      %v210 = vld [vmem:[%s198 + $0x40] sm:$0xf]
      %v211 = vld [vmem:[%s198 + $0x48] sm:$0xf]
      %v212 = vld [vmem:[%s198 + $0x4c] sm:$0xf]
      %v213 = vld [vmem:[%s198 + $0x54] sm:$0xf]
      %v214 = vld [vmem:[%s198 + $0x58] sm:$0xf]
      %v215 = vld [vmem:[%s1] sm:$0x3]
      %v216 = vld [vmem:[%s198 + $0x8] sm:$0x1]
      %v217 = vld [vmem:[%s198 + $0x14] sm:$0x1]
      %v218 = vld [vmem:[%s198 + $0x20] sm:$0x1]
      %v219 = vld [vmem:[%s198 + $0x2c] sm:$0x1]
      %v220 = vld [vmem:[%s198 + $0x38] sm:$0x1]
      %v221 = vld [vmem:[%s198 + $0x44] sm:$0x1]
      %v222 = vld [vmem:[%s198 + $0x50] sm:$0x1]
      %v223 = vld [vmem:[%s198 + $0x5c] sm:$0x1]
      %vm224 = vsmask.f32 3328
      %vm225 = vsmask.f32 7440
      %vm226 = vmor %vm224, %vm225
      %v228 = vshrl.u32 %v199, 16
      %v230 = vrot.slane %v228, 4
      %v231 = vshll.u32 %v199, 16
      %v233 = vrot.slane %v231, 5
      %v234 = vor.u32 %v230, %v233
      %v235 = vrot.slane %v234, 4
      %v237 = vshll.u32 %v200, 16
      %v239 = vrot.slane %v237, 5
      %v240 = vsel %vm226, %v235, %v239
      %v241 = vshrl.u32 %v200, 16
      %v243 = vrot.slane %v241, 4
      %v244 = vor.u32 %v243, %v239
      %v245 = vrot.slane %v244, 4
      %v247 = vshll.u32 %v216, 16
      %v249 = vrot.slane %v247, 5
      %v250 = vsel %vm226, %v245, %v249
      %v252 = vshrl.u32 %v201, 16
      %v254 = vrot.slane %v252, 4
      %v255 = vshll.u32 %v201, 16
      %v257 = vrot.slane %v255, 5
      %v258 = vor.u32 %v254, %v257
      %v259 = vrot.slane %v258, 4
      %v261 = vshll.u32 %v202, 16
      %v263 = vrot.slane %v261, 5
      %v264 = vsel %vm226, %v259, %v263
      %v265 = vshrl.u32 %v202, 16
      %v267 = vrot.slane %v265, 4
      %v268 = vor.u32 %v267, %v263
      %v269 = vrot.slane %v268, 4
      %v271 = vshll.u32 %v217, 16
      %v273 = vrot.slane %v271, 5
      %v274 = vsel %vm226, %v269, %v273
      %v276 = vshrl.u32 %v203, 16
      %v278 = vrot.slane %v276, 4
      %v279 = vshll.u32 %v203, 16
      %v281 = vrot.slane %v279, 5
      %v282 = vor.u32 %v278, %v281
      %v283 = vrot.slane %v282, 4
      %v285 = vshll.u32 %v204, 16
      %v287 = vrot.slane %v285, 5
      %v288 = vsel %vm226, %v283, %v287
      %v289 = vshrl.u32 %v204, 16
      %v291 = vrot.slane %v289, 4
      %v292 = vor.u32 %v291, %v287
      %v293 = vrot.slane %v292, 4
      %v295 = vshll.u32 %v218, 16
      %v297 = vrot.slane %v295, 5
      %v298 = vsel %vm226, %v293, %v297
      %v300 = vshrl.u32 %v205, 16
      %v302 = vrot.slane %v300, 4
      %v303 = vshll.u32 %v205, 16
      %v305 = vrot.slane %v303, 5
      %v306 = vor.u32 %v302, %v305
      %v307 = vrot.slane %v306, 4
      %v309 = vshll.u32 %v206, 16
      %v311 = vrot.slane %v309, 5
      %v312 = vsel %vm226, %v307, %v311
      %v313 = vshrl.u32 %v206, 16
      %v315 = vrot.slane %v313, 4
      %v316 = vor.u32 %v315, %v311
      %v317 = vrot.slane %v316, 4
      %v319 = vshll.u32 %v219, 16
      %v321 = vrot.slane %v319, 5
      %v322 = vsel %vm226, %v317, %v321
      %v324 = vshrl.u32 %v207, 16
      %v326 = vrot.slane %v324, 4
      %v327 = vshll.u32 %v207, 16
      %v329 = vrot.slane %v327, 5
      %v330 = vor.u32 %v326, %v329
      %v331 = vrot.slane %v330, 4
      %v333 = vshll.u32 %v208, 16
      %v335 = vrot.slane %v333, 5
      %v336 = vsel %vm226, %v331, %v335
      %v337 = vshrl.u32 %v208, 16
      %v339 = vrot.slane %v337, 4
      %v340 = vor.u32 %v339, %v335
      %v341 = vrot.slane %v340, 4
      %v343 = vshll.u32 %v220, 16
      %v345 = vrot.slane %v343, 5
      %v346 = vsel %vm226, %v341, %v345
      %v348 = vshrl.u32 %v209, 16
      %v350 = vrot.slane %v348, 4
      %v351 = vshll.u32 %v209, 16
      %v353 = vrot.slane %v351, 5
      %v354 = vor.u32 %v350, %v353
      %v355 = vrot.slane %v354, 4
      %v357 = vshll.u32 %v210, 16
      %v359 = vrot.slane %v357, 5
      %v360 = vsel %vm226, %v355, %v359
      %v361 = vshrl.u32 %v210, 16
      %v363 = vrot.slane %v361, 4
      %v364 = vor.u32 %v363, %v359
      %v365 = vrot.slane %v364, 4
      %v367 = vshll.u32 %v221, 16
      %v369 = vrot.slane %v367, 5
      %v370 = vsel %vm226, %v365, %v369
      %v372 = vshrl.u32 %v211, 16
      %v374 = vrot.slane %v372, 4
      %v375 = vshll.u32 %v211, 16
      %v377 = vrot.slane %v375, 5
      %v378 = vor.u32 %v374, %v377
      %v379 = vrot.slane %v378, 4
      %v381 = vshll.u32 %v212, 16
      %v383 = vrot.slane %v381, 5
      %v384 = vsel %vm226, %v379, %v383
      %v385 = vshrl.u32 %v212, 16
      %v387 = vrot.slane %v385, 4
      %v388 = vor.u32 %v387, %v383
      %v389 = vrot.slane %v388, 4
      %v391 = vshll.u32 %v222, 16
      %v393 = vrot.slane %v391, 5
      %v394 = vsel %vm226, %v389, %v393
      %v396 = vshrl.u32 %v213, 16
      %v398 = vrot.slane %v396, 4
      %v399 = vshll.u32 %v213, 16
      %v401 = vrot.slane %v399, 5
      %v402 = vor.u32 %v398, %v401
      %v403 = vrot.slane %v402, 4
      %v405 = vshll.u32 %v214, 16
      %v407 = vrot.slane %v405, 5
      %v408 = vsel %vm226, %v403, %v407
      %v409 = vshrl.u32 %v214, 16
      %v411 = vrot.slane %v409, 4
      %v412 = vor.u32 %v411, %v407
      %v413 = vrot.slane %v412, 4
      %v415 = vshll.u32 %v223, 16
      %v417 = vrot.slane %v415, 5
      %v418 = vsel %vm226, %v413, %v417
      %s419 = scalar_lea.vmem %s1, 2
      %v420 = vld [vmem:[%s419] sm:$0x3]
      %v421 = vunpack.c.l.b16 %v240
      %v422 = vunpack.c.l.b16 %v250
      %v423 = vunpack.c.l.b16 %v264
      %v424 = vunpack.c.l.b16 %v274
      %v425 = vunpack.c.l.b16 %v288
      %v426 = vunpack.c.l.b16 %v298
      %v427 = vunpack.c.l.b16 %v312
      %v428 = vunpack.c.l.b16 %v322
      %v429 = vunpack.c.l.b16 %v336
      %v430 = vunpack.c.l.b16 %v346
      %v431 = vunpack.c.l.b16 %v360
      %v432 = vunpack.c.l.b16 %v370
      %v433 = vunpack.c.l.b16 %v384
      %v434 = vunpack.c.l.b16 %v394
      %v435 = vunpack.c.l.b16 %v408
      %v436 = vunpack.c.l.b16 %v418
      %v437 = vpack.c.b16 %v422, %v421
      %v438 = vpack.c.b16 %v424, %v423
      %v439 = vpack.c.b16 %v426, %v425
      %v440 = vpack.c.b16 %v428, %v427
      %v441 = vpack.c.b16 %v430, %v429
      %v442 = vpack.c.b16 %v432, %v431
      %v443 = vpack.c.b16 %v434, %v433
      %v444 = vpack.c.b16 %v436, %v435
      %vm445 = vcmask 31744
      %v447 = vsel %vm445, %v437, 0
      %v450 = vsel %vm445, %v438, 0
      %v453 = vsel %vm445, %v439, 0
      %v456 = vsel %vm445, %v440, 0
      %v459 = vsel %vm445, %v441, 0
      %v462 = vsel %vm445, %v442, 0
      %v465 = vsel %vm445, %v443, 0
      %v468 = vsel %vm445, %v444, 0
      %vm470 = vcmask 1041408
      %v472 = vsel %vm470, %v420, 0
      %474 = vmatprep.subr.bf16.mxu0 0
      %475 = vmatpush1.bf16.msra.mxu0 0
      %476 = vmatprep.subr.bf16.mxu0 0
      %477 = vmatpush1.bf16.msra.mxu0 0
      %478 = vmatprep.subr.bf16.mxu0 0
      %479 = vmatpush1.bf16.msra.mxu0 0
      %480 = vmatprep.subr.bf16.mxu0 0
      %481 = vmatpush1.bf16.msra.mxu0 0
      %482 = vmatprep.subr.bf16.mxu0 0
      %483 = vmatpush1.bf16.msra.mxu0 0
      %484 = vmatprep.subr.bf16.mxu0 0
      %485 = vmatpush1.bf16.msra.mxu0 0
      %486 = vmatprep.subr.bf16.mxu0 0
      %487 = vmatpush1.bf16.msra.mxu0 0
      %488 = vmatprep.subr.bf16.mxu0 0
      %489 = vmatpush1.bf16.msra.mxu0 %v472
      %490 = vmatprep.subr.bf16.mxu0 0
      %491 = vmatpush2.bf16.msra.mxu0 0
      %492 = vmatprep.subr.bf16.mxu0 0
      %493 = vmatpush2.bf16.msra.mxu0 0
      %494 = vmatprep.subr.bf16.mxu0 0
      %495 = vmatpush2.bf16.msra.mxu0 0
      %496 = vmatprep.subr.bf16.mxu0 0
      %497 = vmatpush2.bf16.msra.mxu0 0
      %498 = vmatprep.subr.bf16.mxu0 0
      %499 = vmatpush2.bf16.msra.mxu0 0
      %500 = vmatprep.subr.bf16.mxu0 0
      %501 = vmatpush2.bf16.msra.mxu0 0
      %502 = vmatprep.subr.bf16.mxu0 0
      %503 = vmatpush2.bf16.msra.mxu0 0
      %504 = vmatprep.subr.bf16.mxu0 0
      %505 = vmatpush2.bf16.msra.mxu0 0
      %506 = vmatprep.mubr.bf16.mxu0 0
      %507 = vmatmul.mubr.bf16.gmra.mxu0 %v447
      %v508 = vpop.f32.mrf.mxu0
      %v509 = vadd.f32 0.0, %v508
      %v510 = vpop.f32.mrf.mxu0
      %v511 = vpop.f32.mrf.mxu0
      %v512 = vadd.f32 0.0, %v511
      %v513 = vpop.f32.mrf.mxu0
      %514 = vmatprep.mubr.bf16.mxu0 0
      %515 = vmatmul.mubr.bf16.gmra.mxu0 %v450
      %v516 = vpop.f32.mrf.mxu0
      %v517 = vadd.f32 0.0, %v516
      %v518 = vpop.f32.mrf.mxu0
      %v519 = vpop.f32.mrf.mxu0
      %v520 = vadd.f32 0.0, %v519
      %v521 = vpop.f32.mrf.mxu0
      %522 = vmatprep.mubr.bf16.mxu0 0
      %523 = vmatmul.mubr.bf16.gmra.mxu0 %v453
      %v524 = vpop.f32.mrf.mxu0
      %v525 = vadd.f32 0.0, %v524
      %v526 = vpop.f32.mrf.mxu0
      %v527 = vpop.f32.mrf.mxu0
      %v528 = vadd.f32 0.0, %v527
      %v529 = vpop.f32.mrf.mxu0
      %530 = vmatprep.mubr.bf16.mxu0 0
      %531 = vmatmul.mubr.bf16.gmra.mxu0 %v456
      %v532 = vpop.f32.mrf.mxu0
      %v533 = vadd.f32 0.0, %v532
      %v534 = vpop.f32.mrf.mxu0
      %v535 = vpop.f32.mrf.mxu0
      %v536 = vadd.f32 0.0, %v535
      %v537 = vpop.f32.mrf.mxu0
      %538 = vmatprep.mubr.bf16.mxu0 0
      %539 = vmatmul.mubr.bf16.gmra.mxu0 %v459
      %v540 = vpop.f32.mrf.mxu0
      %v541 = vadd.f32 0.0, %v540
      %v542 = vpop.f32.mrf.mxu0
      %v543 = vpop.f32.mrf.mxu0
      %v544 = vadd.f32 0.0, %v543
      %v545 = vpop.f32.mrf.mxu0
      %546 = vmatprep.mubr.bf16.mxu0 0
      %547 = vmatmul.mubr.bf16.gmra.mxu0 %v462
      %v548 = vpop.f32.mrf.mxu0
      %v549 = vadd.f32 0.0, %v548
      %v550 = vpop.f32.mrf.mxu0
      %v551 = vpop.f32.mrf.mxu0
      %v552 = vadd.f32 0.0, %v551
      %v553 = vpop.f32.mrf.mxu0
      %554 = vmatprep.mubr.bf16.mxu0 0
      %555 = vmatmul.mubr.bf16.gmra.mxu0 %v465
      %v556 = vpop.f32.mrf.mxu0
      %v557 = vadd.f32 0.0, %v556
      %v558 = vpop.f32.mrf.mxu0
      %v559 = vpop.f32.mrf.mxu0
      %v560 = vadd.f32 0.0, %v559
      %v561 = vpop.f32.mrf.mxu0
      %562 = vmatprep.mubr.bf16.mxu0 0
      %563 = vmatmul.mubr.bf16.gmra.mxu0 %v468
      %v564 = vpop.f32.mrf.mxu0
      %v565 = vadd.f32 0.0, %v564
      %v566 = vpop.f32.mrf.mxu0
      %v567 = vpop.f32.mrf.mxu0
      %v568 = vadd.f32 0.0, %v567
      %v569 = vpop.f32.mrf.mxu0
      %570 = vdwg.mxu0
      %v587 = vunpack.c.l.b16 %v199
      %v588 = vunpack.c.l.b16 %v200
      %v589 = vunpack.c.l.b16 %v201
      %v590 = vunpack.c.l.b16 %v202
      %v591 = vunpack.c.l.b16 %v203
      %v592 = vunpack.c.l.b16 %v204
      %v593 = vunpack.c.l.b16 %v205
      %v594 = vunpack.c.l.b16 %v206
      %v595 = vunpack.c.l.b16 %v207
      %v596 = vunpack.c.l.b16 %v208
      %v597 = vunpack.c.l.b16 %v209
      %v598 = vunpack.c.l.b16 %v210
      %v599 = vunpack.c.l.b16 %v211
      %v600 = vunpack.c.l.b16 %v212
      %v601 = vunpack.c.l.b16 %v213
      %v602 = vunpack.c.l.b16 %v214
      %v603 = vpack.c.b16 %v588, %v587
      %v604 = vpack.c.b16 %v590, %v589
      %v605 = vpack.c.b16 %v592, %v591
      %v606 = vpack.c.b16 %v594, %v593
      %v607 = vpack.c.b16 %v596, %v595
      %v608 = vpack.c.b16 %v598, %v597
      %v609 = vpack.c.b16 %v600, %v599
      %v610 = vpack.c.b16 %v602, %v601
      %v612 = vsel %vm445, %v603, 0
      %v615 = vsel %vm445, %v604, 0
      %v618 = vsel %vm445, %v605, 0
      %v621 = vsel %vm445, %v606, 0
      %v624 = vsel %vm445, %v607, 0
      %v627 = vsel %vm445, %v608, 0
      %v630 = vsel %vm445, %v609, 0
      %v633 = vsel %vm445, %v610, 0
      %v636 = vsel %vm470, %v215, 0
      %638 = vmatprep.subr.bf16.mxu0 0
      %639 = vmatpush1.bf16.msra.mxu0 0
      %640 = vmatprep.subr.bf16.mxu0 0
      %641 = vmatpush1.bf16.msra.mxu0 0
      %642 = vmatprep.subr.bf16.mxu0 0
      %643 = vmatpush1.bf16.msra.mxu0 0
      %644 = vmatprep.subr.bf16.mxu0 0
      %645 = vmatpush1.bf16.msra.mxu0 0
      %646 = vmatprep.subr.bf16.mxu0 0
      %647 = vmatpush1.bf16.msra.mxu0 0
      %648 = vmatprep.subr.bf16.mxu0 0
      %649 = vmatpush1.bf16.msra.mxu0 0
      %650 = vmatprep.subr.bf16.mxu0 0
      %651 = vmatpush1.bf16.msra.mxu0 0
      %652 = vmatprep.subr.bf16.mxu0 0
      %653 = vmatpush1.bf16.msra.mxu0 %v636
      %654 = vmatprep.subr.bf16.mxu0 0
      %655 = vmatpush2.bf16.msra.mxu0 0
      %656 = vmatprep.subr.bf16.mxu0 0
      %657 = vmatpush2.bf16.msra.mxu0 0
      %658 = vmatprep.subr.bf16.mxu0 0
      %659 = vmatpush2.bf16.msra.mxu0 0
      %660 = vmatprep.subr.bf16.mxu0 0
      %661 = vmatpush2.bf16.msra.mxu0 0
      %662 = vmatprep.subr.bf16.mxu0 0
      %663 = vmatpush2.bf16.msra.mxu0 0
      %664 = vmatprep.subr.bf16.mxu0 0
      %665 = vmatpush2.bf16.msra.mxu0 0
      %666 = vmatprep.subr.bf16.mxu0 0
      %667 = vmatpush2.bf16.msra.mxu0 0
      %668 = vmatprep.subr.bf16.mxu0 0
      %669 = vmatpush2.bf16.msra.mxu0 0
      %670 = vmatprep.mubr.bf16.mxu0 0
      %671 = vmatmul.mubr.bf16.gmra.mxu0 %v612
      %v672 = vpop.f32.mrf.mxu0
      %v673 = vadd.f32 %v509, %v672
      %v674 = vpop.f32.mrf.mxu0
      %v675 = vpop.f32.mrf.mxu0
      %v676 = vadd.f32 %v512, %v675
      %v677 = vpop.f32.mrf.mxu0
      %678 = vmatprep.mubr.bf16.mxu0 0
      %679 = vmatmul.mubr.bf16.gmra.mxu0 %v615
      %v680 = vpop.f32.mrf.mxu0
      %v681 = vadd.f32 %v517, %v680
      %v682 = vpop.f32.mrf.mxu0
      %v683 = vpop.f32.mrf.mxu0
      %v684 = vadd.f32 %v520, %v683
      %v685 = vpop.f32.mrf.mxu0
      %686 = vmatprep.mubr.bf16.mxu0 0
      %687 = vmatmul.mubr.bf16.gmra.mxu0 %v618
      %v688 = vpop.f32.mrf.mxu0
      %v689 = vadd.f32 %v525, %v688
      %v690 = vpop.f32.mrf.mxu0
      %v691 = vpop.f32.mrf.mxu0
      %v692 = vadd.f32 %v528, %v691
      %v693 = vpop.f32.mrf.mxu0
      %694 = vmatprep.mubr.bf16.mxu0 0
      %695 = vmatmul.mubr.bf16.gmra.mxu0 %v621
      %v696 = vpop.f32.mrf.mxu0
      %v697 = vadd.f32 %v533, %v696
      %v698 = vpop.f32.mrf.mxu0
      %v699 = vpop.f32.mrf.mxu0
      %v700 = vadd.f32 %v536, %v699
      %v701 = vpop.f32.mrf.mxu0
      %702 = vmatprep.mubr.bf16.mxu0 0
      %703 = vmatmul.mubr.bf16.gmra.mxu0 %v624
      %v704 = vpop.f32.mrf.mxu0
      %v705 = vadd.f32 %v541, %v704
      %v706 = vpop.f32.mrf.mxu0
      %v707 = vpop.f32.mrf.mxu0
      %v708 = vadd.f32 %v544, %v707
      %v709 = vpop.f32.mrf.mxu0
      %710 = vmatprep.mubr.bf16.mxu0 0
      %711 = vmatmul.mubr.bf16.gmra.mxu0 %v627
      %v712 = vpop.f32.mrf.mxu0
      %v713 = vadd.f32 %v549, %v712
      %v714 = vpop.f32.mrf.mxu0
      %v715 = vpop.f32.mrf.mxu0
      %v716 = vadd.f32 %v552, %v715
      %v717 = vpop.f32.mrf.mxu0
      %718 = vmatprep.mubr.bf16.mxu0 0
      %719 = vmatmul.mubr.bf16.gmra.mxu0 %v630
      %v720 = vpop.f32.mrf.mxu0
      %v721 = vadd.f32 %v557, %v720
      %v722 = vpop.f32.mrf.mxu0
      %v723 = vpop.f32.mrf.mxu0
      %v724 = vadd.f32 %v560, %v723
      %v725 = vpop.f32.mrf.mxu0
      %726 = vmatprep.mubr.bf16.mxu0 0
      %727 = vmatmul.mubr.bf16.gmra.mxu0 %v633
      %v728 = vpop.f32.mrf.mxu0
      %v729 = vadd.f32 %v565, %v728
      %v730 = vpop.f32.mrf.mxu0
      %v731 = vpop.f32.mrf.mxu0
      %v732 = vadd.f32 %v568, %v731
      %v733 = vpop.f32.mrf.mxu0
      %734 = vdwg.mxu0
      %v735 = vld [vmem:[%s198] sm:$0xe]
      %v736 = vld [vmem:[%s198 + $0xc] sm:$0xe]
      %v737 = vld [vmem:[%s198 + $0x18] sm:$0xe]
      %v738 = vld [vmem:[%s198 + $0x24] sm:$0xe]
      %v739 = vld [vmem:[%s198 + $0x30] sm:$0xe]
      %v740 = vld [vmem:[%s198 + $0x3c] sm:$0xe]
      %v741 = vld [vmem:[%s198 + $0x48] sm:$0xe]
      %v742 = vld [vmem:[%s198 + $0x54] sm:$0xe]
      %vm759 = vcmask 1042432
      %vm760 = vcmask 1046532
      %vm761 = vmor %vm759, %vm760
      %v762 = vrot.slane %v735, 5
      %v763 = vrot.slane %v762, 4
      %v764 = vrot.slane %v200, 5
      %v765 = vsel %vm761, %v763, %v764
      %v766 = vrot.slane %v764, 4
      %v767 = vrot.slane %v216, 5
      %v768 = vsel %vm761, %v766, %v767
      %v769 = vrot.slane %v736, 5
      %v770 = vrot.slane %v769, 4
      %v771 = vrot.slane %v202, 5
      %v772 = vsel %vm761, %v770, %v771
      %v773 = vrot.slane %v771, 4
      %v774 = vrot.slane %v217, 5
      %v775 = vsel %vm761, %v773, %v774
      %v776 = vrot.slane %v737, 5
      %v777 = vrot.slane %v776, 4
      %v778 = vrot.slane %v204, 5
      %v779 = vsel %vm761, %v777, %v778
      %v780 = vrot.slane %v778, 4
      %v781 = vrot.slane %v218, 5
      %v782 = vsel %vm761, %v780, %v781
      %v783 = vrot.slane %v738, 5
      %v784 = vrot.slane %v783, 4
      %v785 = vrot.slane %v206, 5
      %v786 = vsel %vm761, %v784, %v785
      %v787 = vrot.slane %v785, 4
      %v788 = vrot.slane %v219, 5
      %v789 = vsel %vm761, %v787, %v788
      %v790 = vrot.slane %v739, 5
      %v791 = vrot.slane %v790, 4
      %v792 = vrot.slane %v208, 5
      %v793 = vsel %vm761, %v791, %v792
      %v794 = vrot.slane %v792, 4
      %v795 = vrot.slane %v220, 5
      %v796 = vsel %vm761, %v794, %v795
      %v797 = vrot.slane %v740, 5
      %v798 = vrot.slane %v797, 4
      %v799 = vrot.slane %v210, 5
      %v800 = vsel %vm761, %v798, %v799
      %v801 = vrot.slane %v799, 4
      %v802 = vrot.slane %v221, 5
      %v803 = vsel %vm761, %v801, %v802
      %v804 = vrot.slane %v741, 5
      %v805 = vrot.slane %v804, 4
      %v806 = vrot.slane %v212, 5
      %v807 = vsel %vm761, %v805, %v806
      %v808 = vrot.slane %v806, 4
      %v809 = vrot.slane %v222, 5
      %v810 = vsel %vm761, %v808, %v809
      %v811 = vrot.slane %v742, 5
      %v812 = vrot.slane %v811, 4
      %v813 = vrot.slane %v214, 5
      %v814 = vsel %vm761, %v812, %v813
      %v815 = vrot.slane %v813, 4
      %v816 = vrot.slane %v223, 5
      %v817 = vsel %vm761, %v815, %v816
      %s818 = scalar_lea.vmem %s1, 4
      %v819 = vld [vmem:[%s818] sm:$0x3]
      %v820 = vunpack.c.l.b16 %v765
      %v821 = vunpack.c.l.b16 %v768
      %v822 = vunpack.c.l.b16 %v772
      %v823 = vunpack.c.l.b16 %v775
      %v824 = vunpack.c.l.b16 %v779
      %v825 = vunpack.c.l.b16 %v782
      %v826 = vunpack.c.l.b16 %v786
      %v827 = vunpack.c.l.b16 %v789
      %v828 = vunpack.c.l.b16 %v793
      %v829 = vunpack.c.l.b16 %v796
      %v830 = vunpack.c.l.b16 %v800
      %v831 = vunpack.c.l.b16 %v803
      %v832 = vunpack.c.l.b16 %v807
      %v833 = vunpack.c.l.b16 %v810
      %v834 = vunpack.c.l.b16 %v814
      %v835 = vunpack.c.l.b16 %v817
      %v836 = vpack.c.b16 %v821, %v820
      %v837 = vpack.c.b16 %v823, %v822
      %v838 = vpack.c.b16 %v825, %v824
      %v839 = vpack.c.b16 %v827, %v826
      %v840 = vpack.c.b16 %v829, %v828
      %v841 = vpack.c.b16 %v831, %v830
      %v842 = vpack.c.b16 %v833, %v832
      %v843 = vpack.c.b16 %v835, %v834
      %v845 = vsel %vm445, %v836, 0
      %v848 = vsel %vm445, %v837, 0
      %v851 = vsel %vm445, %v838, 0
      %v854 = vsel %vm445, %v839, 0
      %v857 = vsel %vm445, %v840, 0
      %v860 = vsel %vm445, %v841, 0
      %v863 = vsel %vm445, %v842, 0
      %v866 = vsel %vm445, %v843, 0
      %v869 = vsel %vm470, %v819, 0
      %871 = vmatprep.subr.bf16.mxu0 0
      %872 = vmatpush1.bf16.msra.mxu0 0
      %873 = vmatprep.subr.bf16.mxu0 0
      %874 = vmatpush1.bf16.msra.mxu0 0
      %875 = vmatprep.subr.bf16.mxu0 0
      %876 = vmatpush1.bf16.msra.mxu0 0
      %877 = vmatprep.subr.bf16.mxu0 0
      %878 = vmatpush1.bf16.msra.mxu0 0
      %879 = vmatprep.subr.bf16.mxu0 0
      %880 = vmatpush1.bf16.msra.mxu0 0
      %881 = vmatprep.subr.bf16.mxu0 0
      %882 = vmatpush1.bf16.msra.mxu0 0
      %883 = vmatprep.subr.bf16.mxu0 0
      %884 = vmatpush1.bf16.msra.mxu0 0
      %885 = vmatprep.subr.bf16.mxu0 0
      %886 = vmatpush1.bf16.msra.mxu0 %v869
      %887 = vmatprep.subr.bf16.mxu0 0
      %888 = vmatpush2.bf16.msra.mxu0 0
      %889 = vmatprep.subr.bf16.mxu0 0
      %890 = vmatpush2.bf16.msra.mxu0 0
      %891 = vmatprep.subr.bf16.mxu0 0
      %892 = vmatpush2.bf16.msra.mxu0 0
      %893 = vmatprep.subr.bf16.mxu0 0
      %894 = vmatpush2.bf16.msra.mxu0 0
      %895 = vmatprep.subr.bf16.mxu0 0
      %896 = vmatpush2.bf16.msra.mxu0 0
      %897 = vmatprep.subr.bf16.mxu0 0
      %898 = vmatpush2.bf16.msra.mxu0 0
      %899 = vmatprep.subr.bf16.mxu0 0
      %900 = vmatpush2.bf16.msra.mxu0 0
      %901 = vmatprep.subr.bf16.mxu0 0
      %902 = vmatpush2.bf16.msra.mxu0 0
      %903 = vmatprep.mubr.bf16.mxu0 0
      %904 = vmatmul.mubr.bf16.gmra.mxu0 %v845
      %v905 = vpop.f32.mrf.mxu0
      %v906 = vadd.f32 0.0, %v905
      %v907 = vpop.f32.mrf.mxu0
      %v908 = vpop.f32.mrf.mxu0
      %v909 = vadd.f32 0.0, %v908
      %v910 = vpop.f32.mrf.mxu0
      %911 = vmatprep.mubr.bf16.mxu0 0
      %912 = vmatmul.mubr.bf16.gmra.mxu0 %v848
      %v913 = vpop.f32.mrf.mxu0
      %v914 = vadd.f32 0.0, %v913
      %v915 = vpop.f32.mrf.mxu0
      %v916 = vpop.f32.mrf.mxu0
      %v917 = vadd.f32 0.0, %v916
      %v918 = vpop.f32.mrf.mxu0
      %919 = vmatprep.mubr.bf16.mxu0 0
      %920 = vmatmul.mubr.bf16.gmra.mxu0 %v851
      %v921 = vpop.f32.mrf.mxu0
      %v922 = vadd.f32 0.0, %v921
      %v923 = vpop.f32.mrf.mxu0
      %v924 = vpop.f32.mrf.mxu0
      %v925 = vadd.f32 0.0, %v924
      %v926 = vpop.f32.mrf.mxu0
      %927 = vmatprep.mubr.bf16.mxu0 0
      %928 = vmatmul.mubr.bf16.gmra.mxu0 %v854
      %v929 = vpop.f32.mrf.mxu0
      %v930 = vadd.f32 0.0, %v929
      %v931 = vpop.f32.mrf.mxu0
      %v932 = vpop.f32.mrf.mxu0
      %v933 = vadd.f32 0.0, %v932
      %v934 = vpop.f32.mrf.mxu0
      %935 = vmatprep.mubr.bf16.mxu0 0
      %936 = vmatmul.mubr.bf16.gmra.mxu0 %v857
      %v937 = vpop.f32.mrf.mxu0
      %v938 = vadd.f32 0.0, %v937
      %v939 = vpop.f32.mrf.mxu0
      %v940 = vpop.f32.mrf.mxu0
      %v941 = vadd.f32 0.0, %v940
      %v942 = vpop.f32.mrf.mxu0
      %943 = vmatprep.mubr.bf16.mxu0 0
      %944 = vmatmul.mubr.bf16.gmra.mxu0 %v860
      %v945 = vpop.f32.mrf.mxu0
      %v946 = vadd.f32 0.0, %v945
      %v947 = vpop.f32.mrf.mxu0
      %v948 = vpop.f32.mrf.mxu0
      %v949 = vadd.f32 0.0, %v948
      %v950 = vpop.f32.mrf.mxu0
      %951 = vmatprep.mubr.bf16.mxu0 0
      %952 = vmatmul.mubr.bf16.gmra.mxu0 %v863
      %v953 = vpop.f32.mrf.mxu0
      %v954 = vadd.f32 0.0, %v953
      %v955 = vpop.f32.mrf.mxu0
      %v956 = vpop.f32.mrf.mxu0
      %v957 = vadd.f32 0.0, %v956
      %v958 = vpop.f32.mrf.mxu0
      %959 = vmatprep.mubr.bf16.mxu0 0
      %960 = vmatmul.mubr.bf16.gmra.mxu0 %v866
      %v961 = vpop.f32.mrf.mxu0
      %v962 = vadd.f32 0.0, %v961
      %v963 = vpop.f32.mrf.mxu0
      %v964 = vpop.f32.mrf.mxu0
      %v965 = vadd.f32 0.0, %v964
      %v966 = vpop.f32.mrf.mxu0
      %967 = vdwg.mxu0
      %v968 = vadd.f32 %v673, %v906
      %v969 = vadd.f32 %v676, %v909
      %v970 = vadd.f32 %v681, %v914
      %v971 = vadd.f32 %v684, %v917
      %v972 = vadd.f32 %v689, %v922
      %v973 = vadd.f32 %v692, %v925
      %v974 = vadd.f32 %v697, %v930
      %v975 = vadd.f32 %v700, %v933
      %v976 = vadd.f32 %v705, %v938
      %v977 = vadd.f32 %v708, %v941
      %v978 = vadd.f32 %v713, %v946
      %v979 = vadd.f32 %v716, %v949
      %v980 = vadd.f32 %v721, %v954
      %v981 = vadd.f32 %v724, %v957
      %v982 = vadd.f32 %v729, %v962
      %v983 = vadd.f32 %v732, %v965
      %s984 = sadd.s32 %s195, 1
      %s985 = smul.u32 %s984, 3
      %s986 = smul.addr %s985, 4
      %s987 = scalar_lea.vmem %s183, %s986
      %v988 = vld [vmem:[%s987] sm:$0xf]
      %v989 = vld [vmem:[%s987 + $0x4] sm:$0xf]
      %v990 = vld [vmem:[%s987 + $0xc] sm:$0xf]
      %v991 = vld [vmem:[%s987 + $0x10] sm:$0xf]
      %v992 = vld [vmem:[%s987 + $0x18] sm:$0xf]
      %v993 = vld [vmem:[%s987 + $0x1c] sm:$0xf]
      %v994 = vld [vmem:[%s987 + $0x24] sm:$0xf]
      %v995 = vld [vmem:[%s987 + $0x28] sm:$0xf]
      %v996 = vld [vmem:[%s987 + $0x30] sm:$0xf]
      %v997 = vld [vmem:[%s987 + $0x34] sm:$0xf]
      %v998 = vld [vmem:[%s987 + $0x3c] sm:$0xf]
      %v999 = vld [vmem:[%s987 + $0x40] sm:$0xf]
      %v1000 = vld [vmem:[%s987 + $0x48] sm:$0xf]
      %v1001 = vld [vmem:[%s987 + $0x4c] sm:$0xf]
      %v1002 = vld [vmem:[%s987 + $0x54] sm:$0xf]
      %v1003 = vld [vmem:[%s987 + $0x58] sm:$0xf]
      %s1004 = scalar_lea.vmem %s1, 6
      %v1005 = vld [vmem:[%s1004] sm:$0x3]
      %v1022 = vunpack.c.l.b16 %v988
      %v1023 = vunpack.c.l.b16 %v989
      %v1024 = vunpack.c.l.b16 %v990
      %v1025 = vunpack.c.l.b16 %v991
      %v1026 = vunpack.c.l.b16 %v992
      %v1027 = vunpack.c.l.b16 %v993
      %v1028 = vunpack.c.l.b16 %v994
      %v1029 = vunpack.c.l.b16 %v995
      %v1030 = vunpack.c.l.b16 %v996
      %v1031 = vunpack.c.l.b16 %v997
      %v1032 = vunpack.c.l.b16 %v998
      %v1033 = vunpack.c.l.b16 %v999
      %v1034 = vunpack.c.l.b16 %v1000
      %v1035 = vunpack.c.l.b16 %v1001
      %v1036 = vunpack.c.l.b16 %v1002
      %v1037 = vunpack.c.l.b16 %v1003
      %v1038 = vpack.c.b16 %v1023, %v1022
      %v1039 = vpack.c.b16 %v1025, %v1024
      %v1040 = vpack.c.b16 %v1027, %v1026
      %v1041 = vpack.c.b16 %v1029, %v1028
      %v1042 = vpack.c.b16 %v1031, %v1030
      %v1043 = vpack.c.b16 %v1033, %v1032
      %v1044 = vpack.c.b16 %v1035, %v1034
      %v1045 = vpack.c.b16 %v1037, %v1036
      %v1047 = vsel %vm445, %v1038, 0
      %v1050 = vsel %vm445, %v1039, 0
      %v1053 = vsel %vm445, %v1040, 0
      %v1056 = vsel %vm445, %v1041, 0
      %v1059 = vsel %vm445, %v1042, 0
      %v1062 = vsel %vm445, %v1043, 0
      %v1065 = vsel %vm445, %v1044, 0
      %v1068 = vsel %vm445, %v1045, 0
      %v1071 = vsel %vm470, %v1005, 0
      %1073 = vmatprep.subr.bf16.mxu0 0
      %1074 = vmatpush1.bf16.msra.mxu0 0
      %1075 = vmatprep.subr.bf16.mxu0 0
      %1076 = vmatpush1.bf16.msra.mxu0 0
      %1077 = vmatprep.subr.bf16.mxu0 0
      %1078 = vmatpush1.bf16.msra.mxu0 0
      %1079 = vmatprep.subr.bf16.mxu0 0
      %1080 = vmatpush1.bf16.msra.mxu0 0
      %1081 = vmatprep.subr.bf16.mxu0 0
      %1082 = vmatpush1.bf16.msra.mxu0 0
      %1083 = vmatprep.subr.bf16.mxu0 0
      %1084 = vmatpush1.bf16.msra.mxu0 0
      %1085 = vmatprep.subr.bf16.mxu0 0
      %1086 = vmatpush1.bf16.msra.mxu0 0
      %1087 = vmatprep.subr.bf16.mxu0 0
      %1088 = vmatpush1.bf16.msra.mxu0 %v1071
      %1089 = vmatprep.subr.bf16.mxu0 0
      %1090 = vmatpush2.bf16.msra.mxu0 0
      %1091 = vmatprep.subr.bf16.mxu0 0
      %1092 = vmatpush2.bf16.msra.mxu0 0
      %1093 = vmatprep.subr.bf16.mxu0 0
      %1094 = vmatpush2.bf16.msra.mxu0 0
      %1095 = vmatprep.subr.bf16.mxu0 0
      %1096 = vmatpush2.bf16.msra.mxu0 0
      %1097 = vmatprep.subr.bf16.mxu0 0
      %1098 = vmatpush2.bf16.msra.mxu0 0
      %1099 = vmatprep.subr.bf16.mxu0 0
      %1100 = vmatpush2.bf16.msra.mxu0 0
      %1101 = vmatprep.subr.bf16.mxu0 0
      %1102 = vmatpush2.bf16.msra.mxu0 0
      %1103 = vmatprep.subr.bf16.mxu0 0
      %1104 = vmatpush2.bf16.msra.mxu0 0
      %1105 = vmatprep.mubr.bf16.mxu0 0
      %1106 = vmatmul.mubr.bf16.gmra.mxu0 %v1047
      %v1107 = vpop.f32.mrf.mxu0
      %v1108 = vadd.f32 0.0, %v1107
      %v1109 = vpop.f32.mrf.mxu0
      %v1110 = vpop.f32.mrf.mxu0
      %v1111 = vadd.f32 0.0, %v1110
      %v1112 = vpop.f32.mrf.mxu0
      %1113 = vmatprep.mubr.bf16.mxu0 0
      %1114 = vmatmul.mubr.bf16.gmra.mxu0 %v1050
      %v1115 = vpop.f32.mrf.mxu0
      %v1116 = vadd.f32 0.0, %v1115
      %v1117 = vpop.f32.mrf.mxu0
      %v1118 = vpop.f32.mrf.mxu0
      %v1119 = vadd.f32 0.0, %v1118
      %v1120 = vpop.f32.mrf.mxu0
      %1121 = vmatprep.mubr.bf16.mxu0 0
      %1122 = vmatmul.mubr.bf16.gmra.mxu0 %v1053
      %v1123 = vpop.f32.mrf.mxu0
      %v1124 = vadd.f32 0.0, %v1123
      %v1125 = vpop.f32.mrf.mxu0
      %v1126 = vpop.f32.mrf.mxu0
      %v1127 = vadd.f32 0.0, %v1126
      %v1128 = vpop.f32.mrf.mxu0
      %1129 = vmatprep.mubr.bf16.mxu0 0
      %1130 = vmatmul.mubr.bf16.gmra.mxu0 %v1056
      %v1131 = vpop.f32.mrf.mxu0
      %v1132 = vadd.f32 0.0, %v1131
      %v1133 = vpop.f32.mrf.mxu0
      %v1134 = vpop.f32.mrf.mxu0
      %v1135 = vadd.f32 0.0, %v1134
      %v1136 = vpop.f32.mrf.mxu0
      %1137 = vmatprep.mubr.bf16.mxu0 0
      %1138 = vmatmul.mubr.bf16.gmra.mxu0 %v1059
      %v1139 = vpop.f32.mrf.mxu0
      %v1140 = vadd.f32 0.0, %v1139
      %v1141 = vpop.f32.mrf.mxu0
      %v1142 = vpop.f32.mrf.mxu0
      %v1143 = vadd.f32 0.0, %v1142
      %v1144 = vpop.f32.mrf.mxu0
      %1145 = vmatprep.mubr.bf16.mxu0 0
      %1146 = vmatmul.mubr.bf16.gmra.mxu0 %v1062
      %v1147 = vpop.f32.mrf.mxu0
      %v1148 = vadd.f32 0.0, %v1147
      %v1149 = vpop.f32.mrf.mxu0
      %v1150 = vpop.f32.mrf.mxu0
      %v1151 = vadd.f32 0.0, %v1150
      %v1152 = vpop.f32.mrf.mxu0
      %1153 = vmatprep.mubr.bf16.mxu0 0
      %1154 = vmatmul.mubr.bf16.gmra.mxu0 %v1065
      %v1155 = vpop.f32.mrf.mxu0
      %v1156 = vadd.f32 0.0, %v1155
      %v1157 = vpop.f32.mrf.mxu0
      %v1158 = vpop.f32.mrf.mxu0
      %v1159 = vadd.f32 0.0, %v1158
      %v1160 = vpop.f32.mrf.mxu0
      %1161 = vmatprep.mubr.bf16.mxu0 0
      %1162 = vmatmul.mubr.bf16.gmra.mxu0 %v1068
      %v1163 = vpop.f32.mrf.mxu0
      %v1164 = vadd.f32 0.0, %v1163
      %v1165 = vpop.f32.mrf.mxu0
      %v1166 = vpop.f32.mrf.mxu0
      %v1167 = vadd.f32 0.0, %v1166
      %v1168 = vpop.f32.mrf.mxu0
      %1169 = vdwg.mxu0
      %v1170 = vadd.f32 %v968, %v1108
      %v1171 = vadd.f32 %v969, %v1111
      %v1172 = vadd.f32 %v970, %v1116
      %v1173 = vadd.f32 %v971, %v1119
      %v1174 = vadd.f32 %v972, %v1124
      %v1175 = vadd.f32 %v973, %v1127
      %v1176 = vadd.f32 %v974, %v1132
      %v1177 = vadd.f32 %v975, %v1135
      %v1178 = vadd.f32 %v976, %v1140
      %v1179 = vadd.f32 %v977, %v1143
      %v1180 = vadd.f32 %v978, %v1148
      %v1181 = vadd.f32 %v979, %v1151
      %v1182 = vadd.f32 %v980, %v1156
      %v1183 = vadd.f32 %v981, %v1159
      %v1184 = vadd.f32 %v982, %v1164
      %v1185 = vadd.f32 %v983, %v1167
      %v1186 = vld [vmem:[%s987] sm:$0xf]
      %v1187 = vld [vmem:[%s987 + $0x4] sm:$0xf]
      %v1188 = vld [vmem:[%s987 + $0x8] sm:$0x1]
      %v1189 = vld [vmem:[%s987 + $0xc] sm:$0xf]
      %v1190 = vld [vmem:[%s987 + $0x10] sm:$0xf]
      %v1191 = vld [vmem:[%s987 + $0x14] sm:$0x1]
      %v1192 = vld [vmem:[%s987 + $0x18] sm:$0xf]
      %v1193 = vld [vmem:[%s987 + $0x1c] sm:$0xf]
      %v1194 = vld [vmem:[%s987 + $0x20] sm:$0x1]
      %v1195 = vld [vmem:[%s987 + $0x24] sm:$0xf]
      %v1196 = vld [vmem:[%s987 + $0x28] sm:$0xf]
      %v1197 = vld [vmem:[%s987 + $0x2c] sm:$0x1]
      %v1198 = vld [vmem:[%s987 + $0x30] sm:$0xf]
      %v1199 = vld [vmem:[%s987 + $0x34] sm:$0xf]
      %v1200 = vld [vmem:[%s987 + $0x38] sm:$0x1]
      %v1201 = vld [vmem:[%s987 + $0x3c] sm:$0xf]
      %v1202 = vld [vmem:[%s987 + $0x40] sm:$0xf]
      %v1203 = vld [vmem:[%s987 + $0x44] sm:$0x1]
      %v1204 = vld [vmem:[%s987 + $0x48] sm:$0xf]
      %v1205 = vld [vmem:[%s987 + $0x4c] sm:$0xf]
      %v1206 = vld [vmem:[%s987 + $0x50] sm:$0x1]
      %v1207 = vld [vmem:[%s987 + $0x54] sm:$0xf]
      %v1208 = vld [vmem:[%s987 + $0x58] sm:$0xf]
      %v1209 = vld [vmem:[%s987 + $0x5c] sm:$0x1]
      %v1211 = vshrl.u32 %v1186, 16
      %v1213 = vrot.slane %v1211, 4
      %v1214 = vshll.u32 %v1186, 16
      %v1216 = vrot.slane %v1214, 5
      %v1217 = vor.u32 %v1213, %v1216
      %v1218 = vrot.slane %v1217, 4
      %v1220 = vshll.u32 %v1187, 16
      %v1222 = vrot.slane %v1220, 5
      %v1223 = vsel %vm226, %v1218, %v1222
      %v1224 = vshrl.u32 %v1187, 16
      %v1226 = vrot.slane %v1224, 4
      %v1227 = vor.u32 %v1226, %v1222
      %v1228 = vrot.slane %v1227, 4
      %v1230 = vshll.u32 %v1188, 16
      %v1232 = vrot.slane %v1230, 5
      %v1233 = vsel %vm226, %v1228, %v1232
      %v1235 = vshrl.u32 %v1189, 16
      %v1237 = vrot.slane %v1235, 4
      %v1238 = vshll.u32 %v1189, 16
      %v1240 = vrot.slane %v1238, 5
      %v1241 = vor.u32 %v1237, %v1240
      %v1242 = vrot.slane %v1241, 4
      %v1244 = vshll.u32 %v1190, 16
      %v1246 = vrot.slane %v1244, 5
      %v1247 = vsel %vm226, %v1242, %v1246
      %v1248 = vshrl.u32 %v1190, 16
      %v1250 = vrot.slane %v1248, 4
      %v1251 = vor.u32 %v1250, %v1246
      %v1252 = vrot.slane %v1251, 4
      %v1254 = vshll.u32 %v1191, 16
      %v1256 = vrot.slane %v1254, 5
      %v1257 = vsel %vm226, %v1252, %v1256
      %v1259 = vshrl.u32 %v1192, 16
      %v1261 = vrot.slane %v1259, 4
      %v1262 = vshll.u32 %v1192, 16
      %v1264 = vrot.slane %v1262, 5
      %v1265 = vor.u32 %v1261, %v1264
      %v1266 = vrot.slane %v1265, 4
      %v1268 = vshll.u32 %v1193, 16
      %v1270 = vrot.slane %v1268, 5
      %v1271 = vsel %vm226, %v1266, %v1270
      %v1272 = vshrl.u32 %v1193, 16
      %v1274 = vrot.slane %v1272, 4
      %v1275 = vor.u32 %v1274, %v1270
      %v1276 = vrot.slane %v1275, 4
      %v1278 = vshll.u32 %v1194, 16
      %v1280 = vrot.slane %v1278, 5
      %v1281 = vsel %vm226, %v1276, %v1280
      %v1283 = vshrl.u32 %v1195, 16
      %v1285 = vrot.slane %v1283, 4
      %v1286 = vshll.u32 %v1195, 16
      %v1288 = vrot.slane %v1286, 5
      %v1289 = vor.u32 %v1285, %v1288
      %v1290 = vrot.slane %v1289, 4
      %v1292 = vshll.u32 %v1196, 16
      %v1294 = vrot.slane %v1292, 5
      %v1295 = vsel %vm226, %v1290, %v1294
      %v1296 = vshrl.u32 %v1196, 16
      %v1298 = vrot.slane %v1296, 4
      %v1299 = vor.u32 %v1298, %v1294
      %v1300 = vrot.slane %v1299, 4
      %v1302 = vshll.u32 %v1197, 16
      %v1304 = vrot.slane %v1302, 5
      %v1305 = vsel %vm226, %v1300, %v1304
      %v1307 = vshrl.u32 %v1198, 16
      %v1309 = vrot.slane %v1307, 4
      %v1310 = vshll.u32 %v1198, 16
      %v1312 = vrot.slane %v1310, 5
      %v1313 = vor.u32 %v1309, %v1312
      %v1314 = vrot.slane %v1313, 4
      %v1316 = vshll.u32 %v1199, 16
      %v1318 = vrot.slane %v1316, 5
      %v1319 = vsel %vm226, %v1314, %v1318
      %v1320 = vshrl.u32 %v1199, 16
      %v1322 = vrot.slane %v1320, 4
      %v1323 = vor.u32 %v1322, %v1318
      %v1324 = vrot.slane %v1323, 4
      %v1326 = vshll.u32 %v1200, 16
      %v1328 = vrot.slane %v1326, 5
      %v1329 = vsel %vm226, %v1324, %v1328
      %v1331 = vshrl.u32 %v1201, 16
      %v1333 = vrot.slane %v1331, 4
      %v1334 = vshll.u32 %v1201, 16
      %v1336 = vrot.slane %v1334, 5
      %v1337 = vor.u32 %v1333, %v1336
      %v1338 = vrot.slane %v1337, 4
      %v1340 = vshll.u32 %v1202, 16
      %v1342 = vrot.slane %v1340, 5
      %v1343 = vsel %vm226, %v1338, %v1342
      %v1344 = vshrl.u32 %v1202, 16
      %v1346 = vrot.slane %v1344, 4
      %v1347 = vor.u32 %v1346, %v1342
      %v1348 = vrot.slane %v1347, 4
      %v1350 = vshll.u32 %v1203, 16
      %v1352 = vrot.slane %v1350, 5
      %v1353 = vsel %vm226, %v1348, %v1352
      %v1355 = vshrl.u32 %v1204, 16
      %v1357 = vrot.slane %v1355, 4
      %v1358 = vshll.u32 %v1204, 16
      %v1360 = vrot.slane %v1358, 5
      %v1361 = vor.u32 %v1357, %v1360
      %v1362 = vrot.slane %v1361, 4
      %v1364 = vshll.u32 %v1205, 16
      %v1366 = vrot.slane %v1364, 5
      %v1367 = vsel %vm226, %v1362, %v1366
      %v1368 = vshrl.u32 %v1205, 16
      %v1370 = vrot.slane %v1368, 4
      %v1371 = vor.u32 %v1370, %v1366
      %v1372 = vrot.slane %v1371, 4
      %v1374 = vshll.u32 %v1206, 16
      %v1376 = vrot.slane %v1374, 5
      %v1377 = vsel %vm226, %v1372, %v1376
      %v1379 = vshrl.u32 %v1207, 16
      %v1381 = vrot.slane %v1379, 4
      %v1382 = vshll.u32 %v1207, 16
      %v1384 = vrot.slane %v1382, 5
      %v1385 = vor.u32 %v1381, %v1384
      %v1386 = vrot.slane %v1385, 4
      %v1388 = vshll.u32 %v1208, 16
      %v1390 = vrot.slane %v1388, 5
      %v1391 = vsel %vm226, %v1386, %v1390
      %v1392 = vshrl.u32 %v1208, 16
      %v1394 = vrot.slane %v1392, 4
      %v1395 = vor.u32 %v1394, %v1390
      %v1396 = vrot.slane %v1395, 4
      %v1398 = vshll.u32 %v1209, 16
      %v1400 = vrot.slane %v1398, 5
      %v1401 = vsel %vm226, %v1396, %v1400
      %s1402 = scalar_lea.vmem %s1, 8
      %v1403 = vld [vmem:[%s1402] sm:$0x3]
      %v1404 = vunpack.c.l.b16 %v1223
      %v1405 = vunpack.c.l.b16 %v1233
      %v1406 = vunpack.c.l.b16 %v1247
      %v1407 = vunpack.c.l.b16 %v1257
      %v1408 = vunpack.c.l.b16 %v1271
      %v1409 = vunpack.c.l.b16 %v1281
      %v1410 = vunpack.c.l.b16 %v1295
      %v1411 = vunpack.c.l.b16 %v1305
      %v1412 = vunpack.c.l.b16 %v1319
      %v1413 = vunpack.c.l.b16 %v1329
      %v1414 = vunpack.c.l.b16 %v1343
      %v1415 = vunpack.c.l.b16 %v1353
      %v1416 = vunpack.c.l.b16 %v1367
      %v1417 = vunpack.c.l.b16 %v1377
      %v1418 = vunpack.c.l.b16 %v1391
      %v1419 = vunpack.c.l.b16 %v1401
      %v1420 = vpack.c.b16 %v1405, %v1404
      %v1421 = vpack.c.b16 %v1407, %v1406
      %v1422 = vpack.c.b16 %v1409, %v1408
      %v1423 = vpack.c.b16 %v1411, %v1410
      %v1424 = vpack.c.b16 %v1413, %v1412
      %v1425 = vpack.c.b16 %v1415, %v1414
      %v1426 = vpack.c.b16 %v1417, %v1416
      %v1427 = vpack.c.b16 %v1419, %v1418
      %v1429 = vsel %vm445, %v1420, 0
      %v1432 = vsel %vm445, %v1421, 0
      %v1435 = vsel %vm445, %v1422, 0
      %v1438 = vsel %vm445, %v1423, 0
      %v1441 = vsel %vm445, %v1424, 0
      %v1444 = vsel %vm445, %v1425, 0
      %v1447 = vsel %vm445, %v1426, 0
      %v1450 = vsel %vm445, %v1427, 0
      %v1453 = vsel %vm470, %v1403, 0
      %1455 = vmatprep.subr.bf16.mxu0 0
      %1456 = vmatpush1.bf16.msra.mxu0 0
      %1457 = vmatprep.subr.bf16.mxu0 0
      %1458 = vmatpush1.bf16.msra.mxu0 0
      %1459 = vmatprep.subr.bf16.mxu0 0
      %1460 = vmatpush1.bf16.msra.mxu0 0
      %1461 = vmatprep.subr.bf16.mxu0 0
      %1462 = vmatpush1.bf16.msra.mxu0 0
      %1463 = vmatprep.subr.bf16.mxu0 0
      %1464 = vmatpush1.bf16.msra.mxu0 0
      %1465 = vmatprep.subr.bf16.mxu0 0
      %1466 = vmatpush1.bf16.msra.mxu0 0
      %1467 = vmatprep.subr.bf16.mxu0 0
      %1468 = vmatpush1.bf16.msra.mxu0 0
      %1469 = vmatprep.subr.bf16.mxu0 0
      %1470 = vmatpush1.bf16.msra.mxu0 %v1453
      %1471 = vmatprep.subr.bf16.mxu0 0
      %1472 = vmatpush2.bf16.msra.mxu0 0
      %1473 = vmatprep.subr.bf16.mxu0 0
      %1474 = vmatpush2.bf16.msra.mxu0 0
      %1475 = vmatprep.subr.bf16.mxu0 0
      %1476 = vmatpush2.bf16.msra.mxu0 0
      %1477 = vmatprep.subr.bf16.mxu0 0
      %1478 = vmatpush2.bf16.msra.mxu0 0
      %1479 = vmatprep.subr.bf16.mxu0 0
      %1480 = vmatpush2.bf16.msra.mxu0 0
      %1481 = vmatprep.subr.bf16.mxu0 0
      %1482 = vmatpush2.bf16.msra.mxu0 0
      %1483 = vmatprep.subr.bf16.mxu0 0
      %1484 = vmatpush2.bf16.msra.mxu0 0
      %1485 = vmatprep.subr.bf16.mxu0 0
      %1486 = vmatpush2.bf16.msra.mxu0 0
      %1487 = vmatprep.mubr.bf16.mxu0 0
      %1488 = vmatmul.mubr.bf16.gmra.mxu0 %v1429
      %v1489 = vpop.f32.mrf.mxu0
      %v1490 = vadd.f32 0.0, %v1489
      %v1491 = vpop.f32.mrf.mxu0
      %v1492 = vpop.f32.mrf.mxu0
      %v1493 = vadd.f32 0.0, %v1492
      %v1494 = vpop.f32.mrf.mxu0
      %1495 = vmatprep.mubr.bf16.mxu0 0
      %1496 = vmatmul.mubr.bf16.gmra.mxu0 %v1432
      %v1497 = vpop.f32.mrf.mxu0
      %v1498 = vadd.f32 0.0, %v1497
      %v1499 = vpop.f32.mrf.mxu0
      %v1500 = vpop.f32.mrf.mxu0
      %v1501 = vadd.f32 0.0, %v1500
      %v1502 = vpop.f32.mrf.mxu0
      %1503 = vmatprep.mubr.bf16.mxu0 0
      %1504 = vmatmul.mubr.bf16.gmra.mxu0 %v1435
      %v1505 = vpop.f32.mrf.mxu0
      %v1506 = vadd.f32 0.0, %v1505
      %v1507 = vpop.f32.mrf.mxu0
      %v1508 = vpop.f32.mrf.mxu0
      %v1509 = vadd.f32 0.0, %v1508
      %v1510 = vpop.f32.mrf.mxu0
      %1511 = vmatprep.mubr.bf16.mxu0 0
      %1512 = vmatmul.mubr.bf16.gmra.mxu0 %v1438
      %v1513 = vpop.f32.mrf.mxu0
      %v1514 = vadd.f32 0.0, %v1513
      %v1515 = vpop.f32.mrf.mxu0
      %v1516 = vpop.f32.mrf.mxu0
      %v1517 = vadd.f32 0.0, %v1516
      %v1518 = vpop.f32.mrf.mxu0
      %1519 = vmatprep.mubr.bf16.mxu0 0
      %1520 = vmatmul.mubr.bf16.gmra.mxu0 %v1441
      %v1521 = vpop.f32.mrf.mxu0
      %v1522 = vadd.f32 0.0, %v1521
      %v1523 = vpop.f32.mrf.mxu0
      %v1524 = vpop.f32.mrf.mxu0
      %v1525 = vadd.f32 0.0, %v1524
      %v1526 = vpop.f32.mrf.mxu0
      %1527 = vmatprep.mubr.bf16.mxu0 0
      %1528 = vmatmul.mubr.bf16.gmra.mxu0 %v1444
      %v1529 = vpop.f32.mrf.mxu0
      %v1530 = vadd.f32 0.0, %v1529
      %v1531 = vpop.f32.mrf.mxu0
      %v1532 = vpop.f32.mrf.mxu0
      %v1533 = vadd.f32 0.0, %v1532
      %v1534 = vpop.f32.mrf.mxu0
      %1535 = vmatprep.mubr.bf16.mxu0 0
      %1536 = vmatmul.mubr.bf16.gmra.mxu0 %v1447
      %v1537 = vpop.f32.mrf.mxu0
      %v1538 = vadd.f32 0.0, %v1537
      %v1539 = vpop.f32.mrf.mxu0
      %v1540 = vpop.f32.mrf.mxu0
      %v1541 = vadd.f32 0.0, %v1540
      %v1542 = vpop.f32.mrf.mxu0
      %1543 = vmatprep.mubr.bf16.mxu0 0
      %1544 = vmatmul.mubr.bf16.gmra.mxu0 %v1450
      %v1545 = vpop.f32.mrf.mxu0
      %v1546 = vadd.f32 0.0, %v1545
      %v1547 = vpop.f32.mrf.mxu0
      %v1548 = vpop.f32.mrf.mxu0
      %v1549 = vadd.f32 0.0, %v1548
      %v1550 = vpop.f32.mrf.mxu0
      %1551 = vdwg.mxu0
      %v1552 = vadd.f32 %v1170, %v1490
      %v1553 = vadd.f32 %v1171, %v1493
      %v1554 = vadd.f32 %v1172, %v1498
      %v1555 = vadd.f32 %v1173, %v1501
      %v1556 = vadd.f32 %v1174, %v1506
      %v1557 = vadd.f32 %v1175, %v1509
      %v1558 = vadd.f32 %v1176, %v1514
      %v1559 = vadd.f32 %v1177, %v1517
      %v1560 = vadd.f32 %v1178, %v1522
      %v1561 = vadd.f32 %v1179, %v1525
      %v1562 = vadd.f32 %v1180, %v1530
      %v1563 = vadd.f32 %v1181, %v1533
      %v1564 = vadd.f32 %v1182, %v1538
      %v1565 = vadd.f32 %v1183, %v1541
      %v1566 = vadd.f32 %v1184, %v1546
      %v1567 = vadd.f32 %v1185, %v1549
      %v1568 = vld [vmem:[%s987] sm:$0xe]
      %v1569 = vld [vmem:[%s987 + $0xc] sm:$0xe]
      %v1570 = vld [vmem:[%s987 + $0x18] sm:$0xe]
      %v1571 = vld [vmem:[%s987 + $0x24] sm:$0xe]
      %v1572 = vld [vmem:[%s987 + $0x30] sm:$0xe]
      %v1573 = vld [vmem:[%s987 + $0x3c] sm:$0xe]
      %v1574 = vld [vmem:[%s987 + $0x48] sm:$0xe]
      %v1575 = vld [vmem:[%s987 + $0x54] sm:$0xe]
      %v1600 = vrot.slane %v1568, 5
      %v1601 = vrot.slane %v1600, 4
      %v1602 = vrot.slane %v1187, 5
      %v1603 = vsel %vm761, %v1601, %v1602
      %v1604 = vrot.slane %v1602, 4
      %v1605 = vrot.slane %v1188, 5
      %v1606 = vsel %vm761, %v1604, %v1605
      %v1607 = vrot.slane %v1569, 5
      %v1608 = vrot.slane %v1607, 4
      %v1609 = vrot.slane %v1190, 5
      %v1610 = vsel %vm761, %v1608, %v1609
      %v1611 = vrot.slane %v1609, 4
      %v1612 = vrot.slane %v1191, 5
      %v1613 = vsel %vm761, %v1611, %v1612
      %v1614 = vrot.slane %v1570, 5
      %v1615 = vrot.slane %v1614, 4
      %v1616 = vrot.slane %v1193, 5
      %v1617 = vsel %vm761, %v1615, %v1616
      %v1618 = vrot.slane %v1616, 4
      %v1619 = vrot.slane %v1194, 5
      %v1620 = vsel %vm761, %v1618, %v1619
      %v1621 = vrot.slane %v1571, 5
      %v1622 = vrot.slane %v1621, 4
      %v1623 = vrot.slane %v1196, 5
      %v1624 = vsel %vm761, %v1622, %v1623
      %v1625 = vrot.slane %v1623, 4
      %v1626 = vrot.slane %v1197, 5
      %v1627 = vsel %vm761, %v1625, %v1626
      %v1628 = vrot.slane %v1572, 5
      %v1629 = vrot.slane %v1628, 4
      %v1630 = vrot.slane %v1199, 5
      %v1631 = vsel %vm761, %v1629, %v1630
      %v1632 = vrot.slane %v1630, 4
      %v1633 = vrot.slane %v1200, 5
      %v1634 = vsel %vm761, %v1632, %v1633
      %v1635 = vrot.slane %v1573, 5
      %v1636 = vrot.slane %v1635, 4
      %v1637 = vrot.slane %v1202, 5
      %v1638 = vsel %vm761, %v1636, %v1637
      %v1639 = vrot.slane %v1637, 4
      %v1640 = vrot.slane %v1203, 5
      %v1641 = vsel %vm761, %v1639, %v1640
      %v1642 = vrot.slane %v1574, 5
      %v1643 = vrot.slane %v1642, 4
      %v1644 = vrot.slane %v1205, 5
      %v1645 = vsel %vm761, %v1643, %v1644
      %v1646 = vrot.slane %v1644, 4
      %v1647 = vrot.slane %v1206, 5
      %v1648 = vsel %vm761, %v1646, %v1647
      %v1649 = vrot.slane %v1575, 5
      %v1650 = vrot.slane %v1649, 4
      %v1651 = vrot.slane %v1208, 5
      %v1652 = vsel %vm761, %v1650, %v1651
      %v1653 = vrot.slane %v1651, 4
      %v1654 = vrot.slane %v1209, 5
      %v1655 = vsel %vm761, %v1653, %v1654
      %s1656 = scalar_lea.vmem %s1, 10
      %v1657 = vld [vmem:[%s1656] sm:$0x3]
      %v1658 = vunpack.c.l.b16 %v1603
      %v1659 = vunpack.c.l.b16 %v1606
      %v1660 = vunpack.c.l.b16 %v1610
      %v1661 = vunpack.c.l.b16 %v1613
      %v1662 = vunpack.c.l.b16 %v1617
      %v1663 = vunpack.c.l.b16 %v1620
      %v1664 = vunpack.c.l.b16 %v1624
      %v1665 = vunpack.c.l.b16 %v1627
      %v1666 = vunpack.c.l.b16 %v1631
      %v1667 = vunpack.c.l.b16 %v1634
      %v1668 = vunpack.c.l.b16 %v1638
      %v1669 = vunpack.c.l.b16 %v1641
      %v1670 = vunpack.c.l.b16 %v1645
      %v1671 = vunpack.c.l.b16 %v1648
      %v1672 = vunpack.c.l.b16 %v1652
      %v1673 = vunpack.c.l.b16 %v1655
      %v1674 = vpack.c.b16 %v1659, %v1658
      %v1675 = vpack.c.b16 %v1661, %v1660
      %v1676 = vpack.c.b16 %v1663, %v1662
      %v1677 = vpack.c.b16 %v1665, %v1664
      %v1678 = vpack.c.b16 %v1667, %v1666
      %v1679 = vpack.c.b16 %v1669, %v1668
      %v1680 = vpack.c.b16 %v1671, %v1670
      %v1681 = vpack.c.b16 %v1673, %v1672
      %v1683 = vsel %vm445, %v1674, 0
      %v1686 = vsel %vm445, %v1675, 0
      %v1689 = vsel %vm445, %v1676, 0
      %v1692 = vsel %vm445, %v1677, 0
      %v1695 = vsel %vm445, %v1678, 0
      %v1698 = vsel %vm445, %v1679, 0
      %v1701 = vsel %vm445, %v1680, 0
      %v1704 = vsel %vm445, %v1681, 0
      %v1707 = vsel %vm470, %v1657, 0
      %1709 = vmatprep.subr.bf16.mxu0 0
      %1710 = vmatpush1.bf16.msra.mxu0 0
      %1711 = vmatprep.subr.bf16.mxu0 0
      %1712 = vmatpush1.bf16.msra.mxu0 0
      %1713 = vmatprep.subr.bf16.mxu0 0
      %1714 = vmatpush1.bf16.msra.mxu0 0
      %1715 = vmatprep.subr.bf16.mxu0 0
      %1716 = vmatpush1.bf16.msra.mxu0 0
      %1717 = vmatprep.subr.bf16.mxu0 0
      %1718 = vmatpush1.bf16.msra.mxu0 0
      %1719 = vmatprep.subr.bf16.mxu0 0
      %1720 = vmatpush1.bf16.msra.mxu0 0
      %1721 = vmatprep.subr.bf16.mxu0 0
      %1722 = vmatpush1.bf16.msra.mxu0 0
      %1723 = vmatprep.subr.bf16.mxu0 0
      %1724 = vmatpush1.bf16.msra.mxu0 %v1707
      %1725 = vmatprep.subr.bf16.mxu0 0
      %1726 = vmatpush2.bf16.msra.mxu0 0
      %1727 = vmatprep.subr.bf16.mxu0 0
      %1728 = vmatpush2.bf16.msra.mxu0 0
      %1729 = vmatprep.subr.bf16.mxu0 0
      %1730 = vmatpush2.bf16.msra.mxu0 0
      %1731 = vmatprep.subr.bf16.mxu0 0
      %1732 = vmatpush2.bf16.msra.mxu0 0
      %1733 = vmatprep.subr.bf16.mxu0 0
      %1734 = vmatpush2.bf16.msra.mxu0 0
      %1735 = vmatprep.subr.bf16.mxu0 0
      %1736 = vmatpush2.bf16.msra.mxu0 0
      %1737 = vmatprep.subr.bf16.mxu0 0
      %1738 = vmatpush2.bf16.msra.mxu0 0
      %1739 = vmatprep.subr.bf16.mxu0 0
      %1740 = vmatpush2.bf16.msra.mxu0 0
      %1741 = vmatprep.mubr.bf16.mxu0 0
      %1742 = vmatmul.mubr.bf16.gmra.mxu0 %v1683
      %v1743 = vpop.f32.mrf.mxu0
      %v1744 = vadd.f32 0.0, %v1743
      %v1745 = vpop.f32.mrf.mxu0
      %v1746 = vpop.f32.mrf.mxu0
      %v1747 = vadd.f32 0.0, %v1746
      %v1748 = vpop.f32.mrf.mxu0
      %1749 = vmatprep.mubr.bf16.mxu0 0
      %1750 = vmatmul.mubr.bf16.gmra.mxu0 %v1686
      %v1751 = vpop.f32.mrf.mxu0
      %v1752 = vadd.f32 0.0, %v1751
      %v1753 = vpop.f32.mrf.mxu0
      %v1754 = vpop.f32.mrf.mxu0
      %v1755 = vadd.f32 0.0, %v1754
      %v1756 = vpop.f32.mrf.mxu0
      %1757 = vmatprep.mubr.bf16.mxu0 0
      %1758 = vmatmul.mubr.bf16.gmra.mxu0 %v1689
      %v1759 = vpop.f32.mrf.mxu0
      %v1760 = vadd.f32 0.0, %v1759
      %v1761 = vpop.f32.mrf.mxu0
      %v1762 = vpop.f32.mrf.mxu0
      %v1763 = vadd.f32 0.0, %v1762
      %v1764 = vpop.f32.mrf.mxu0
      %1765 = vmatprep.mubr.bf16.mxu0 0
      %1766 = vmatmul.mubr.bf16.gmra.mxu0 %v1692
      %v1767 = vpop.f32.mrf.mxu0
      %v1768 = vadd.f32 0.0, %v1767
      %v1769 = vpop.f32.mrf.mxu0
      %v1770 = vpop.f32.mrf.mxu0
      %v1771 = vadd.f32 0.0, %v1770
      %v1772 = vpop.f32.mrf.mxu0
      %1773 = vmatprep.mubr.bf16.mxu0 0
      %1774 = vmatmul.mubr.bf16.gmra.mxu0 %v1695
      %v1775 = vpop.f32.mrf.mxu0
      %v1776 = vadd.f32 0.0, %v1775
      %v1777 = vpop.f32.mrf.mxu0
      %v1778 = vpop.f32.mrf.mxu0
      %v1779 = vadd.f32 0.0, %v1778
      %v1780 = vpop.f32.mrf.mxu0
      %1781 = vmatprep.mubr.bf16.mxu0 0
      %1782 = vmatmul.mubr.bf16.gmra.mxu0 %v1698
      %v1783 = vpop.f32.mrf.mxu0
      %v1784 = vadd.f32 0.0, %v1783
      %v1785 = vpop.f32.mrf.mxu0
      %v1786 = vpop.f32.mrf.mxu0
      %v1787 = vadd.f32 0.0, %v1786
      %v1788 = vpop.f32.mrf.mxu0
      %1789 = vmatprep.mubr.bf16.mxu0 0
      %1790 = vmatmul.mubr.bf16.gmra.mxu0 %v1701
      %v1791 = vpop.f32.mrf.mxu0
      %v1792 = vadd.f32 0.0, %v1791
      %v1793 = vpop.f32.mrf.mxu0
      %v1794 = vpop.f32.mrf.mxu0
      %v1795 = vadd.f32 0.0, %v1794
      %v1796 = vpop.f32.mrf.mxu0
      %1797 = vmatprep.mubr.bf16.mxu0 0
      %1798 = vmatmul.mubr.bf16.gmra.mxu0 %v1704
      %v1799 = vpop.f32.mrf.mxu0
      %v1800 = vadd.f32 0.0, %v1799
      %v1801 = vpop.f32.mrf.mxu0
      %v1802 = vpop.f32.mrf.mxu0
      %v1803 = vadd.f32 0.0, %v1802
      %v1804 = vpop.f32.mrf.mxu0
      %1805 = vdwg.mxu0
      %v1806 = vadd.f32 %v1552, %v1744
      %v1807 = vadd.f32 %v1553, %v1747
      %v1808 = vadd.f32 %v1554, %v1752
      %v1809 = vadd.f32 %v1555, %v1755
      %v1810 = vadd.f32 %v1556, %v1760
      %v1811 = vadd.f32 %v1557, %v1763
      %v1812 = vadd.f32 %v1558, %v1768
      %v1813 = vadd.f32 %v1559, %v1771
      %v1814 = vadd.f32 %v1560, %v1776
      %v1815 = vadd.f32 %v1561, %v1779
      %v1816 = vadd.f32 %v1562, %v1784
      %v1817 = vadd.f32 %v1563, %v1787
      %v1818 = vadd.f32 %v1564, %v1792
      %v1819 = vadd.f32 %v1565, %v1795
      %v1820 = vadd.f32 %v1566, %v1800
      %v1821 = vadd.f32 %v1567, %v1803
      %s1822 = sadd.s32 %s195, 2
      %s1823 = smul.u32 %s1822, 3
      %s1824 = smul.addr %s1823, 4
      %s1825 = scalar_lea.vmem %s183, %s1824
      %v1826 = vld [vmem:[%s1825] sm:$0xf]
      %v1827 = vld [vmem:[%s1825 + $0x4] sm:$0xf]
      %v1828 = vld [vmem:[%s1825 + $0xc] sm:$0xf]
      %v1829 = vld [vmem:[%s1825 + $0x10] sm:$0xf]
      %v1830 = vld [vmem:[%s1825 + $0x18] sm:$0xf]
      %v1831 = vld [vmem:[%s1825 + $0x1c] sm:$0xf]
      %v1832 = vld [vmem:[%s1825 + $0x24] sm:$0xf]
      %v1833 = vld [vmem:[%s1825 + $0x28] sm:$0xf]
      %v1834 = vld [vmem:[%s1825 + $0x30] sm:$0xf]
      %v1835 = vld [vmem:[%s1825 + $0x34] sm:$0xf]
      %v1836 = vld [vmem:[%s1825 + $0x3c] sm:$0xf]
      %v1837 = vld [vmem:[%s1825 + $0x40] sm:$0xf]
      %v1838 = vld [vmem:[%s1825 + $0x48] sm:$0xf]
      %v1839 = vld [vmem:[%s1825 + $0x4c] sm:$0xf]
      %v1840 = vld [vmem:[%s1825 + $0x54] sm:$0xf]
      %v1841 = vld [vmem:[%s1825 + $0x58] sm:$0xf]
      %s1842 = scalar_lea.vmem %s1, 12
      %v1843 = vld [vmem:[%s1842] sm:$0x3]
      %v1860 = vunpack.c.l.b16 %v1826
      %v1861 = vunpack.c.l.b16 %v1827
      %v1862 = vunpack.c.l.b16 %v1828
      %v1863 = vunpack.c.l.b16 %v1829
      %v1864 = vunpack.c.l.b16 %v1830
      %v1865 = vunpack.c.l.b16 %v1831
      %v1866 = vunpack.c.l.b16 %v1832
      %v1867 = vunpack.c.l.b16 %v1833
      %v1868 = vunpack.c.l.b16 %v1834
      %v1869 = vunpack.c.l.b16 %v1835
      %v1870 = vunpack.c.l.b16 %v1836
      %v1871 = vunpack.c.l.b16 %v1837
      %v1872 = vunpack.c.l.b16 %v1838
      %v1873 = vunpack.c.l.b16 %v1839
      %v1874 = vunpack.c.l.b16 %v1840
      %v1875 = vunpack.c.l.b16 %v1841
      %v1876 = vpack.c.b16 %v1861, %v1860
      %v1877 = vpack.c.b16 %v1863, %v1862
      %v1878 = vpack.c.b16 %v1865, %v1864
      %v1879 = vpack.c.b16 %v1867, %v1866
      %v1880 = vpack.c.b16 %v1869, %v1868
      %v1881 = vpack.c.b16 %v1871, %v1870
      %v1882 = vpack.c.b16 %v1873, %v1872
      %v1883 = vpack.c.b16 %v1875, %v1874
      %v1885 = vsel %vm445, %v1876, 0
      %v1888 = vsel %vm445, %v1877, 0
      %v1891 = vsel %vm445, %v1878, 0
      %v1894 = vsel %vm445, %v1879, 0
      %v1897 = vsel %vm445, %v1880, 0
      %v1900 = vsel %vm445, %v1881, 0
      %v1903 = vsel %vm445, %v1882, 0
      %v1906 = vsel %vm445, %v1883, 0
      %v1909 = vsel %vm470, %v1843, 0
      %1911 = vmatprep.subr.bf16.mxu0 0
      %1912 = vmatpush1.bf16.msra.mxu0 0
      %1913 = vmatprep.subr.bf16.mxu0 0
      %1914 = vmatpush1.bf16.msra.mxu0 0
      %1915 = vmatprep.subr.bf16.mxu0 0
      %1916 = vmatpush1.bf16.msra.mxu0 0
      %1917 = vmatprep.subr.bf16.mxu0 0
      %1918 = vmatpush1.bf16.msra.mxu0 0
      %1919 = vmatprep.subr.bf16.mxu0 0
      %1920 = vmatpush1.bf16.msra.mxu0 0
      %1921 = vmatprep.subr.bf16.mxu0 0
      %1922 = vmatpush1.bf16.msra.mxu0 0
      %1923 = vmatprep.subr.bf16.mxu0 0
      %1924 = vmatpush1.bf16.msra.mxu0 0
      %1925 = vmatprep.subr.bf16.mxu0 0
      %1926 = vmatpush1.bf16.msra.mxu0 %v1909
      %1927 = vmatprep.subr.bf16.mxu0 0
      %1928 = vmatpush2.bf16.msra.mxu0 0
      %1929 = vmatprep.subr.bf16.mxu0 0
      %1930 = vmatpush2.bf16.msra.mxu0 0
      %1931 = vmatprep.subr.bf16.mxu0 0
      %1932 = vmatpush2.bf16.msra.mxu0 0
      %1933 = vmatprep.subr.bf16.mxu0 0
      %1934 = vmatpush2.bf16.msra.mxu0 0
      %1935 = vmatprep.subr.bf16.mxu0 0
      %1936 = vmatpush2.bf16.msra.mxu0 0
      %1937 = vmatprep.subr.bf16.mxu0 0
      %1938 = vmatpush2.bf16.msra.mxu0 0
      %1939 = vmatprep.subr.bf16.mxu0 0
      %1940 = vmatpush2.bf16.msra.mxu0 0
      %1941 = vmatprep.subr.bf16.mxu0 0
      %1942 = vmatpush2.bf16.msra.mxu0 0
      %1943 = vmatprep.mubr.bf16.mxu0 0
      %1944 = vmatmul.mubr.bf16.gmra.mxu0 %v1885
      %v1945 = vpop.f32.mrf.mxu0
      %v1946 = vadd.f32 0.0, %v1945
      %v1947 = vpop.f32.mrf.mxu0
      %v1948 = vpop.f32.mrf.mxu0
      %v1949 = vadd.f32 0.0, %v1948
      %v1950 = vpop.f32.mrf.mxu0
      %1951 = vmatprep.mubr.bf16.mxu0 0
      %1952 = vmatmul.mubr.bf16.gmra.mxu0 %v1888
      %v1953 = vpop.f32.mrf.mxu0
      %v1954 = vadd.f32 0.0, %v1953
      %v1955 = vpop.f32.mrf.mxu0
      %v1956 = vpop.f32.mrf.mxu0
      %v1957 = vadd.f32 0.0, %v1956
      %v1958 = vpop.f32.mrf.mxu0
      %1959 = vmatprep.mubr.bf16.mxu0 0
      %1960 = vmatmul.mubr.bf16.gmra.mxu0 %v1891
      %v1961 = vpop.f32.mrf.mxu0
      %v1962 = vadd.f32 0.0, %v1961
      %v1963 = vpop.f32.mrf.mxu0
      %v1964 = vpop.f32.mrf.mxu0
      %v1965 = vadd.f32 0.0, %v1964
      %v1966 = vpop.f32.mrf.mxu0
      %1967 = vmatprep.mubr.bf16.mxu0 0
      %1968 = vmatmul.mubr.bf16.gmra.mxu0 %v1894
      %v1969 = vpop.f32.mrf.mxu0
      %v1970 = vadd.f32 0.0, %v1969
      %v1971 = vpop.f32.mrf.mxu0
      %v1972 = vpop.f32.mrf.mxu0
      %v1973 = vadd.f32 0.0, %v1972
      %v1974 = vpop.f32.mrf.mxu0
      %1975 = vmatprep.mubr.bf16.mxu0 0
      %1976 = vmatmul.mubr.bf16.gmra.mxu0 %v1897
      %v1977 = vpop.f32.mrf.mxu0
      %v1978 = vadd.f32 0.0, %v1977
      %v1979 = vpop.f32.mrf.mxu0
      %v1980 = vpop.f32.mrf.mxu0
      %v1981 = vadd.f32 0.0, %v1980
      %v1982 = vpop.f32.mrf.mxu0
      %1983 = vmatprep.mubr.bf16.mxu0 0
      %1984 = vmatmul.mubr.bf16.gmra.mxu0 %v1900
      %v1985 = vpop.f32.mrf.mxu0
      %v1986 = vadd.f32 0.0, %v1985
      %v1987 = vpop.f32.mrf.mxu0
      %v1988 = vpop.f32.mrf.mxu0
      %v1989 = vadd.f32 0.0, %v1988
      %v1990 = vpop.f32.mrf.mxu0
      %1991 = vmatprep.mubr.bf16.mxu0 0
      %1992 = vmatmul.mubr.bf16.gmra.mxu0 %v1903
      %v1993 = vpop.f32.mrf.mxu0
      %v1994 = vadd.f32 0.0, %v1993
      %v1995 = vpop.f32.mrf.mxu0
      %v1996 = vpop.f32.mrf.mxu0
      %v1997 = vadd.f32 0.0, %v1996
      %v1998 = vpop.f32.mrf.mxu0
      %1999 = vmatprep.mubr.bf16.mxu0 0
      %2000 = vmatmul.mubr.bf16.gmra.mxu0 %v1906
      %v2001 = vpop.f32.mrf.mxu0
      %v2002 = vadd.f32 0.0, %v2001
      %v2003 = vpop.f32.mrf.mxu0
      %v2004 = vpop.f32.mrf.mxu0
      %v2005 = vadd.f32 0.0, %v2004
      %v2006 = vpop.f32.mrf.mxu0
      %2007 = vdwg.mxu0
      %v2008 = vadd.f32 %v1806, %v1946
      %v2009 = vadd.f32 %v1807, %v1949
      %v2010 = vadd.f32 %v1808, %v1954
      %v2011 = vadd.f32 %v1809, %v1957
      %v2012 = vadd.f32 %v1810, %v1962
      %v2013 = vadd.f32 %v1811, %v1965
      %v2014 = vadd.f32 %v1812, %v1970
      %v2015 = vadd.f32 %v1813, %v1973
      %v2016 = vadd.f32 %v1814, %v1978
      %v2017 = vadd.f32 %v1815, %v1981
      %v2018 = vadd.f32 %v1816, %v1986
      %v2019 = vadd.f32 %v1817, %v1989
      %v2020 = vadd.f32 %v1818, %v1994
      %v2021 = vadd.f32 %v1819, %v1997
      %v2022 = vadd.f32 %v1820, %v2002
      %v2023 = vadd.f32 %v1821, %v2005
      %v2024 = vld [vmem:[%s1825] sm:$0xf]
      %v2025 = vld [vmem:[%s1825 + $0x4] sm:$0xf]
      %v2026 = vld [vmem:[%s1825 + $0x8] sm:$0x1]
      %v2027 = vld [vmem:[%s1825 + $0xc] sm:$0xf]
      %v2028 = vld [vmem:[%s1825 + $0x10] sm:$0xf]
      %v2029 = vld [vmem:[%s1825 + $0x14] sm:$0x1]
      %v2030 = vld [vmem:[%s1825 + $0x18] sm:$0xf]
      %v2031 = vld [vmem:[%s1825 + $0x1c] sm:$0xf]
      %v2032 = vld [vmem:[%s1825 + $0x20] sm:$0x1]
      %v2033 = vld [vmem:[%s1825 + $0x24] sm:$0xf]
      %v2034 = vld [vmem:[%s1825 + $0x28] sm:$0xf]
      %v2035 = vld [vmem:[%s1825 + $0x2c] sm:$0x1]
      %v2036 = vld [vmem:[%s1825 + $0x30] sm:$0xf]
      %v2037 = vld [vmem:[%s1825 + $0x34] sm:$0xf]
      %v2038 = vld [vmem:[%s1825 + $0x38] sm:$0x1]
      %v2039 = vld [vmem:[%s1825 + $0x3c] sm:$0xf]
      %v2040 = vld [vmem:[%s1825 + $0x40] sm:$0xf]
      %v2041 = vld [vmem:[%s1825 + $0x44] sm:$0x1]
      %v2042 = vld [vmem:[%s1825 + $0x48] sm:$0xf]
      %v2043 = vld [vmem:[%s1825 + $0x4c] sm:$0xf]
      %v2044 = vld [vmem:[%s1825 + $0x50] sm:$0x1]
      %v2045 = vld [vmem:[%s1825 + $0x54] sm:$0xf]
      %v2046 = vld [vmem:[%s1825 + $0x58] sm:$0xf]
      %v2047 = vld [vmem:[%s1825 + $0x5c] sm:$0x1]
      %v2049 = vshrl.u32 %v2024, 16
      %v2051 = vrot.slane %v2049, 4
      %v2052 = vshll.u32 %v2024, 16
      %v2054 = vrot.slane %v2052, 5
      %v2055 = vor.u32 %v2051, %v2054
      %v2056 = vrot.slane %v2055, 4
      %v2058 = vshll.u32 %v2025, 16
      %v2060 = vrot.slane %v2058, 5
      %v2061 = vsel %vm226, %v2056, %v2060
      %v2062 = vshrl.u32 %v2025, 16
      %v2064 = vrot.slane %v2062, 4
      %v2065 = vor.u32 %v2064, %v2060
      %v2066 = vrot.slane %v2065, 4
      %v2068 = vshll.u32 %v2026, 16
      %v2070 = vrot.slane %v2068, 5
      %v2071 = vsel %vm226, %v2066, %v2070
      %v2073 = vshrl.u32 %v2027, 16
      %v2075 = vrot.slane %v2073, 4
      %v2076 = vshll.u32 %v2027, 16
      %v2078 = vrot.slane %v2076, 5
      %v2079 = vor.u32 %v2075, %v2078
      %v2080 = vrot.slane %v2079, 4
      %v2082 = vshll.u32 %v2028, 16
      %v2084 = vrot.slane %v2082, 5
      %v2085 = vsel %vm226, %v2080, %v2084
      %v2086 = vshrl.u32 %v2028, 16
      %v2088 = vrot.slane %v2086, 4
      %v2089 = vor.u32 %v2088, %v2084
      %v2090 = vrot.slane %v2089, 4
      %v2092 = vshll.u32 %v2029, 16
      %v2094 = vrot.slane %v2092, 5
      %v2095 = vsel %vm226, %v2090, %v2094
      %v2097 = vshrl.u32 %v2030, 16
      %v2099 = vrot.slane %v2097, 4
      %v2100 = vshll.u32 %v2030, 16
      %v2102 = vrot.slane %v2100, 5
      %v2103 = vor.u32 %v2099, %v2102
      %v2104 = vrot.slane %v2103, 4
      %v2106 = vshll.u32 %v2031, 16
      %v2108 = vrot.slane %v2106, 5
      %v2109 = vsel %vm226, %v2104, %v2108
      %v2110 = vshrl.u32 %v2031, 16
      %v2112 = vrot.slane %v2110, 4
      %v2113 = vor.u32 %v2112, %v2108
      %v2114 = vrot.slane %v2113, 4
      %v2116 = vshll.u32 %v2032, 16
      %v2118 = vrot.slane %v2116, 5
      %v2119 = vsel %vm226, %v2114, %v2118
      %v2121 = vshrl.u32 %v2033, 16
      %v2123 = vrot.slane %v2121, 4
      %v2124 = vshll.u32 %v2033, 16
      %v2126 = vrot.slane %v2124, 5
      %v2127 = vor.u32 %v2123, %v2126
      %v2128 = vrot.slane %v2127, 4
      %v2130 = vshll.u32 %v2034, 16
      %v2132 = vrot.slane %v2130, 5
      %v2133 = vsel %vm226, %v2128, %v2132
      %v2134 = vshrl.u32 %v2034, 16
      %v2136 = vrot.slane %v2134, 4
      %v2137 = vor.u32 %v2136, %v2132
      %v2138 = vrot.slane %v2137, 4
      %v2140 = vshll.u32 %v2035, 16
      %v2142 = vrot.slane %v2140, 5
      %v2143 = vsel %vm226, %v2138, %v2142
      %v2145 = vshrl.u32 %v2036, 16
      %v2147 = vrot.slane %v2145, 4
      %v2148 = vshll.u32 %v2036, 16
      %v2150 = vrot.slane %v2148, 5
      %v2151 = vor.u32 %v2147, %v2150
      %v2152 = vrot.slane %v2151, 4
      %v2154 = vshll.u32 %v2037, 16
      %v2156 = vrot.slane %v2154, 5
      %v2157 = vsel %vm226, %v2152, %v2156
      %v2158 = vshrl.u32 %v2037, 16
      %v2160 = vrot.slane %v2158, 4
      %v2161 = vor.u32 %v2160, %v2156
      %v2162 = vrot.slane %v2161, 4
      %v2164 = vshll.u32 %v2038, 16
      %v2166 = vrot.slane %v2164, 5
      %v2167 = vsel %vm226, %v2162, %v2166
      %v2169 = vshrl.u32 %v2039, 16
      %v2171 = vrot.slane %v2169, 4
      %v2172 = vshll.u32 %v2039, 16
      %v2174 = vrot.slane %v2172, 5
      %v2175 = vor.u32 %v2171, %v2174
      %v2176 = vrot.slane %v2175, 4
      %v2178 = vshll.u32 %v2040, 16
      %v2180 = vrot.slane %v2178, 5
      %v2181 = vsel %vm226, %v2176, %v2180
      %v2182 = vshrl.u32 %v2040, 16
      %v2184 = vrot.slane %v2182, 4
      %v2185 = vor.u32 %v2184, %v2180
      %v2186 = vrot.slane %v2185, 4
      %v2188 = vshll.u32 %v2041, 16
      %v2190 = vrot.slane %v2188, 5
      %v2191 = vsel %vm226, %v2186, %v2190
      %v2193 = vshrl.u32 %v2042, 16
      %v2195 = vrot.slane %v2193, 4
      %v2196 = vshll.u32 %v2042, 16
      %v2198 = vrot.slane %v2196, 5
      %v2199 = vor.u32 %v2195, %v2198
      %v2200 = vrot.slane %v2199, 4
      %v2202 = vshll.u32 %v2043, 16
      %v2204 = vrot.slane %v2202, 5
      %v2205 = vsel %vm226, %v2200, %v2204
      %v2206 = vshrl.u32 %v2043, 16
      %v2208 = vrot.slane %v2206, 4
      %v2209 = vor.u32 %v2208, %v2204
      %v2210 = vrot.slane %v2209, 4
      %v2212 = vshll.u32 %v2044, 16
      %v2214 = vrot.slane %v2212, 5
      %v2215 = vsel %vm226, %v2210, %v2214
      %v2217 = vshrl.u32 %v2045, 16
      %v2219 = vrot.slane %v2217, 4
      %v2220 = vshll.u32 %v2045, 16
      %v2222 = vrot.slane %v2220, 5
      %v2223 = vor.u32 %v2219, %v2222
      %v2224 = vrot.slane %v2223, 4
      %v2226 = vshll.u32 %v2046, 16
      %v2228 = vrot.slane %v2226, 5
      %v2229 = vsel %vm226, %v2224, %v2228
      %v2230 = vshrl.u32 %v2046, 16
      %v2232 = vrot.slane %v2230, 4
      %v2233 = vor.u32 %v2232, %v2228
      %v2234 = vrot.slane %v2233, 4
      %v2236 = vshll.u32 %v2047, 16
      %v2238 = vrot.slane %v2236, 5
      %v2239 = vsel %vm226, %v2234, %v2238
      %s2240 = scalar_lea.vmem %s1, 14
      %v2241 = vld [vmem:[%s2240] sm:$0x3]
      %v2242 = vunpack.c.l.b16 %v2061
      %v2243 = vunpack.c.l.b16 %v2071
      %v2244 = vunpack.c.l.b16 %v2085
      %v2245 = vunpack.c.l.b16 %v2095
      %v2246 = vunpack.c.l.b16 %v2109
      %v2247 = vunpack.c.l.b16 %v2119
      %v2248 = vunpack.c.l.b16 %v2133
      %v2249 = vunpack.c.l.b16 %v2143
      %v2250 = vunpack.c.l.b16 %v2157
      %v2251 = vunpack.c.l.b16 %v2167
      %v2252 = vunpack.c.l.b16 %v2181
      %v2253 = vunpack.c.l.b16 %v2191
      %v2254 = vunpack.c.l.b16 %v2205
      %v2255 = vunpack.c.l.b16 %v2215
      %v2256 = vunpack.c.l.b16 %v2229
      %v2257 = vunpack.c.l.b16 %v2239
      %v2258 = vpack.c.b16 %v2243, %v2242
      %v2259 = vpack.c.b16 %v2245, %v2244
      %v2260 = vpack.c.b16 %v2247, %v2246
      %v2261 = vpack.c.b16 %v2249, %v2248
      %v2262 = vpack.c.b16 %v2251, %v2250
      %v2263 = vpack.c.b16 %v2253, %v2252
      %v2264 = vpack.c.b16 %v2255, %v2254
      %v2265 = vpack.c.b16 %v2257, %v2256
      %v2267 = vsel %vm445, %v2258, 0
      %v2270 = vsel %vm445, %v2259, 0
      %v2273 = vsel %vm445, %v2260, 0
      %v2276 = vsel %vm445, %v2261, 0
      %v2279 = vsel %vm445, %v2262, 0
      %v2282 = vsel %vm445, %v2263, 0
      %v2285 = vsel %vm445, %v2264, 0
      %v2288 = vsel %vm445, %v2265, 0
      %v2291 = vsel %vm470, %v2241, 0
      %2293 = vmatprep.subr.bf16.mxu0 0
      %2294 = vmatpush1.bf16.msra.mxu0 0
      %2295 = vmatprep.subr.bf16.mxu0 0
      %2296 = vmatpush1.bf16.msra.mxu0 0
      %2297 = vmatprep.subr.bf16.mxu0 0
      %2298 = vmatpush1.bf16.msra.mxu0 0
      %2299 = vmatprep.subr.bf16.mxu0 0
      %2300 = vmatpush1.bf16.msra.mxu0 0
      %2301 = vmatprep.subr.bf16.mxu0 0
      %2302 = vmatpush1.bf16.msra.mxu0 0
      %2303 = vmatprep.subr.bf16.mxu0 0
      %2304 = vmatpush1.bf16.msra.mxu0 0
      %2305 = vmatprep.subr.bf16.mxu0 0
      %2306 = vmatpush1.bf16.msra.mxu0 0
      %2307 = vmatprep.subr.bf16.mxu0 0
      %2308 = vmatpush1.bf16.msra.mxu0 %v2291
      %2309 = vmatprep.subr.bf16.mxu0 0
      %2310 = vmatpush2.bf16.msra.mxu0 0
      %2311 = vmatprep.subr.bf16.mxu0 0
      %2312 = vmatpush2.bf16.msra.mxu0 0
      %2313 = vmatprep.subr.bf16.mxu0 0
      %2314 = vmatpush2.bf16.msra.mxu0 0
      %2315 = vmatprep.subr.bf16.mxu0 0
      %2316 = vmatpush2.bf16.msra.mxu0 0
      %2317 = vmatprep.subr.bf16.mxu0 0
      %2318 = vmatpush2.bf16.msra.mxu0 0
      %2319 = vmatprep.subr.bf16.mxu0 0
      %2320 = vmatpush2.bf16.msra.mxu0 0
      %2321 = vmatprep.subr.bf16.mxu0 0
      %2322 = vmatpush2.bf16.msra.mxu0 0
      %2323 = vmatprep.subr.bf16.mxu0 0
      %2324 = vmatpush2.bf16.msra.mxu0 0
      %2325 = vmatprep.mubr.bf16.mxu0 0
      %2326 = vmatmul.mubr.bf16.gmra.mxu0 %v2267
      %v2327 = vpop.f32.mrf.mxu0
      %v2328 = vadd.f32 0.0, %v2327
      %v2329 = vpop.f32.mrf.mxu0
      %v2330 = vpop.f32.mrf.mxu0
      %v2331 = vadd.f32 0.0, %v2330
      %v2332 = vpop.f32.mrf.mxu0
      %2333 = vmatprep.mubr.bf16.mxu0 0
      %2334 = vmatmul.mubr.bf16.gmra.mxu0 %v2270
      %v2335 = vpop.f32.mrf.mxu0
      %v2336 = vadd.f32 0.0, %v2335
      %v2337 = vpop.f32.mrf.mxu0
      %v2338 = vpop.f32.mrf.mxu0
      %v2339 = vadd.f32 0.0, %v2338
      %v2340 = vpop.f32.mrf.mxu0
      %2341 = vmatprep.mubr.bf16.mxu0 0
      %2342 = vmatmul.mubr.bf16.gmra.mxu0 %v2273
      %v2343 = vpop.f32.mrf.mxu0
      %v2344 = vadd.f32 0.0, %v2343
      %v2345 = vpop.f32.mrf.mxu0
      %v2346 = vpop.f32.mrf.mxu0
      %v2347 = vadd.f32 0.0, %v2346
      %v2348 = vpop.f32.mrf.mxu0
      %2349 = vmatprep.mubr.bf16.mxu0 0
      %2350 = vmatmul.mubr.bf16.gmra.mxu0 %v2276
      %v2351 = vpop.f32.mrf.mxu0
      %v2352 = vadd.f32 0.0, %v2351
      %v2353 = vpop.f32.mrf.mxu0
      %v2354 = vpop.f32.mrf.mxu0
      %v2355 = vadd.f32 0.0, %v2354
      %v2356 = vpop.f32.mrf.mxu0
      %2357 = vmatprep.mubr.bf16.mxu0 0
      %2358 = vmatmul.mubr.bf16.gmra.mxu0 %v2279
      %v2359 = vpop.f32.mrf.mxu0
      %v2360 = vadd.f32 0.0, %v2359
      %v2361 = vpop.f32.mrf.mxu0
      %v2362 = vpop.f32.mrf.mxu0
      %v2363 = vadd.f32 0.0, %v2362
      %v2364 = vpop.f32.mrf.mxu0
      %2365 = vmatprep.mubr.bf16.mxu0 0
      %2366 = vmatmul.mubr.bf16.gmra.mxu0 %v2282
      %v2367 = vpop.f32.mrf.mxu0
      %v2368 = vadd.f32 0.0, %v2367
      %v2369 = vpop.f32.mrf.mxu0
      %v2370 = vpop.f32.mrf.mxu0
      %v2371 = vadd.f32 0.0, %v2370
      %v2372 = vpop.f32.mrf.mxu0
      %2373 = vmatprep.mubr.bf16.mxu0 0
      %2374 = vmatmul.mubr.bf16.gmra.mxu0 %v2285
      %v2375 = vpop.f32.mrf.mxu0
      %v2376 = vadd.f32 0.0, %v2375
      %v2377 = vpop.f32.mrf.mxu0
      %v2378 = vpop.f32.mrf.mxu0
      %v2379 = vadd.f32 0.0, %v2378
      %v2380 = vpop.f32.mrf.mxu0
      %2381 = vmatprep.mubr.bf16.mxu0 0
      %2382 = vmatmul.mubr.bf16.gmra.mxu0 %v2288
      %v2383 = vpop.f32.mrf.mxu0
      %v2384 = vadd.f32 0.0, %v2383
      %v2385 = vpop.f32.mrf.mxu0
      %v2386 = vpop.f32.mrf.mxu0
      %v2387 = vadd.f32 0.0, %v2386
      %v2388 = vpop.f32.mrf.mxu0
      %2389 = vdwg.mxu0
      %v2390 = vadd.f32 %v2008, %v2328
      %v2391 = vadd.f32 %v2009, %v2331
      %v2392 = vadd.f32 %v2010, %v2336
      %v2393 = vadd.f32 %v2011, %v2339
      %v2394 = vadd.f32 %v2012, %v2344
      %v2395 = vadd.f32 %v2013, %v2347
      %v2396 = vadd.f32 %v2014, %v2352
      %v2397 = vadd.f32 %v2015, %v2355
      %v2398 = vadd.f32 %v2016, %v2360
      %v2399 = vadd.f32 %v2017, %v2363
      %v2400 = vadd.f32 %v2018, %v2368
      %v2401 = vadd.f32 %v2019, %v2371
      %v2402 = vadd.f32 %v2020, %v2376
      %v2403 = vadd.f32 %v2021, %v2379
      %v2404 = vadd.f32 %v2022, %v2384
      %v2405 = vadd.f32 %v2023, %v2387
      %v2406 = vld [vmem:[%s1825] sm:$0xe]
      %v2407 = vld [vmem:[%s1825 + $0xc] sm:$0xe]
      %v2408 = vld [vmem:[%s1825 + $0x18] sm:$0xe]
      %v2409 = vld [vmem:[%s1825 + $0x24] sm:$0xe]
      %v2410 = vld [vmem:[%s1825 + $0x30] sm:$0xe]
      %v2411 = vld [vmem:[%s1825 + $0x3c] sm:$0xe]
      %v2412 = vld [vmem:[%s1825 + $0x48] sm:$0xe]
      %v2413 = vld [vmem:[%s1825 + $0x54] sm:$0xe]
      %v2438 = vrot.slane %v2406, 5
      %v2439 = vrot.slane %v2438, 4
      %v2440 = vrot.slane %v2025, 5
      %v2441 = vsel %vm761, %v2439, %v2440
      %v2442 = vrot.slane %v2440, 4
      %v2443 = vrot.slane %v2026, 5
      %v2444 = vsel %vm761, %v2442, %v2443
      %v2445 = vrot.slane %v2407, 5
      %v2446 = vrot.slane %v2445, 4
      %v2447 = vrot.slane %v2028, 5
      %v2448 = vsel %vm761, %v2446, %v2447
      %v2449 = vrot.slane %v2447, 4
      %v2450 = vrot.slane %v2029, 5
      %v2451 = vsel %vm761, %v2449, %v2450
      %v2452 = vrot.slane %v2408, 5
      %v2453 = vrot.slane %v2452, 4
      %v2454 = vrot.slane %v2031, 5
      %v2455 = vsel %vm761, %v2453, %v2454
      %v2456 = vrot.slane %v2454, 4
      %v2457 = vrot.slane %v2032, 5
      %v2458 = vsel %vm761, %v2456, %v2457
      %v2459 = vrot.slane %v2409, 5
      %v2460 = vrot.slane %v2459, 4
      %v2461 = vrot.slane %v2034, 5
      %v2462 = vsel %vm761, %v2460, %v2461
      %v2463 = vrot.slane %v2461, 4
      %v2464 = vrot.slane %v2035, 5
      %v2465 = vsel %vm761, %v2463, %v2464
      %v2466 = vrot.slane %v2410, 5
      %v2467 = vrot.slane %v2466, 4
      %v2468 = vrot.slane %v2037, 5
      %v2469 = vsel %vm761, %v2467, %v2468
      %v2470 = vrot.slane %v2468, 4
      %v2471 = vrot.slane %v2038, 5
      %v2472 = vsel %vm761, %v2470, %v2471
      %v2473 = vrot.slane %v2411, 5
      %v2474 = vrot.slane %v2473, 4
      %v2475 = vrot.slane %v2040, 5
      %v2476 = vsel %vm761, %v2474, %v2475
      %v2477 = vrot.slane %v2475, 4
      %v2478 = vrot.slane %v2041, 5
      %v2479 = vsel %vm761, %v2477, %v2478
      %v2480 = vrot.slane %v2412, 5
      %v2481 = vrot.slane %v2480, 4
      %v2482 = vrot.slane %v2043, 5
      %v2483 = vsel %vm761, %v2481, %v2482
      %v2484 = vrot.slane %v2482, 4
      %v2485 = vrot.slane %v2044, 5
      %v2486 = vsel %vm761, %v2484, %v2485
      %v2487 = vrot.slane %v2413, 5
      %v2488 = vrot.slane %v2487, 4
      %v2489 = vrot.slane %v2046, 5
      %v2490 = vsel %vm761, %v2488, %v2489
      %v2491 = vrot.slane %v2489, 4
      %v2492 = vrot.slane %v2047, 5
      %v2493 = vsel %vm761, %v2491, %v2492
      %s2494 = scalar_lea.vmem %s1, 16
      %v2495 = vld [vmem:[%s2494] sm:$0x3]
      %v2496 = vunpack.c.l.b16 %v2441
      %v2497 = vunpack.c.l.b16 %v2444
      %v2498 = vunpack.c.l.b16 %v2448
      %v2499 = vunpack.c.l.b16 %v2451
      %v2500 = vunpack.c.l.b16 %v2455
      %v2501 = vunpack.c.l.b16 %v2458
      %v2502 = vunpack.c.l.b16 %v2462
      %v2503 = vunpack.c.l.b16 %v2465
      %v2504 = vunpack.c.l.b16 %v2469
      %v2505 = vunpack.c.l.b16 %v2472
      %v2506 = vunpack.c.l.b16 %v2476
      %v2507 = vunpack.c.l.b16 %v2479
      %v2508 = vunpack.c.l.b16 %v2483
      %v2509 = vunpack.c.l.b16 %v2486
      %v2510 = vunpack.c.l.b16 %v2490
      %v2511 = vunpack.c.l.b16 %v2493
      %v2512 = vpack.c.b16 %v2497, %v2496
      %v2513 = vpack.c.b16 %v2499, %v2498
      %v2514 = vpack.c.b16 %v2501, %v2500
      %v2515 = vpack.c.b16 %v2503, %v2502
      %v2516 = vpack.c.b16 %v2505, %v2504
      %v2517 = vpack.c.b16 %v2507, %v2506
      %v2518 = vpack.c.b16 %v2509, %v2508
      %v2519 = vpack.c.b16 %v2511, %v2510
      %v2521 = vsel %vm445, %v2512, 0
      %v2524 = vsel %vm445, %v2513, 0
      %v2527 = vsel %vm445, %v2514, 0
      %v2530 = vsel %vm445, %v2515, 0
      %v2533 = vsel %vm445, %v2516, 0
      %v2536 = vsel %vm445, %v2517, 0
      %v2539 = vsel %vm445, %v2518, 0
      %v2542 = vsel %vm445, %v2519, 0
      %v2545 = vsel %vm470, %v2495, 0
      %2547 = vmatprep.subr.bf16.mxu0 0
      %2548 = vmatpush1.bf16.msra.mxu0 0
      %2549 = vmatprep.subr.bf16.mxu0 0
      %2550 = vmatpush1.bf16.msra.mxu0 0
      %2551 = vmatprep.subr.bf16.mxu0 0
      %2552 = vmatpush1.bf16.msra.mxu0 0
      %2553 = vmatprep.subr.bf16.mxu0 0
      %2554 = vmatpush1.bf16.msra.mxu0 0
      %2555 = vmatprep.subr.bf16.mxu0 0
      %2556 = vmatpush1.bf16.msra.mxu0 0
      %2557 = vmatprep.subr.bf16.mxu0 0
      %2558 = vmatpush1.bf16.msra.mxu0 0
      %2559 = vmatprep.subr.bf16.mxu0 0
      %2560 = vmatpush1.bf16.msra.mxu0 0
      %2561 = vmatprep.subr.bf16.mxu0 0
      %2562 = vmatpush1.bf16.msra.mxu0 %v2545
      %2563 = vmatprep.subr.bf16.mxu0 0
      %2564 = vmatpush2.bf16.msra.mxu0 0
      %2565 = vmatprep.subr.bf16.mxu0 0
      %2566 = vmatpush2.bf16.msra.mxu0 0
      %2567 = vmatprep.subr.bf16.mxu0 0
      %2568 = vmatpush2.bf16.msra.mxu0 0
      %2569 = vmatprep.subr.bf16.mxu0 0
      %2570 = vmatpush2.bf16.msra.mxu0 0
      %2571 = vmatprep.subr.bf16.mxu0 0
      %2572 = vmatpush2.bf16.msra.mxu0 0
      %2573 = vmatprep.subr.bf16.mxu0 0
      %2574 = vmatpush2.bf16.msra.mxu0 0
      %2575 = vmatprep.subr.bf16.mxu0 0
      %2576 = vmatpush2.bf16.msra.mxu0 0
      %2577 = vmatprep.subr.bf16.mxu0 0
      %2578 = vmatpush2.bf16.msra.mxu0 0
      %2579 = vmatprep.mubr.bf16.mxu0 0
      %2580 = vmatmul.mubr.bf16.gmra.mxu0 %v2521
      %v2581 = vpop.f32.mrf.mxu0
      %v2582 = vadd.f32 0.0, %v2581
      %v2583 = vpop.f32.mrf.mxu0
      %v2584 = vpop.f32.mrf.mxu0
      %v2585 = vadd.f32 0.0, %v2584
      %v2586 = vpop.f32.mrf.mxu0
      %2587 = vmatprep.mubr.bf16.mxu0 0
      %2588 = vmatmul.mubr.bf16.gmra.mxu0 %v2524
      %v2589 = vpop.f32.mrf.mxu0
      %v2590 = vadd.f32 0.0, %v2589
      %v2591 = vpop.f32.mrf.mxu0
      %v2592 = vpop.f32.mrf.mxu0
      %v2593 = vadd.f32 0.0, %v2592
      %v2594 = vpop.f32.mrf.mxu0
      %2595 = vmatprep.mubr.bf16.mxu0 0
      %2596 = vmatmul.mubr.bf16.gmra.mxu0 %v2527
      %v2597 = vpop.f32.mrf.mxu0
      %v2598 = vadd.f32 0.0, %v2597
      %v2599 = vpop.f32.mrf.mxu0
      %v2600 = vpop.f32.mrf.mxu0
      %v2601 = vadd.f32 0.0, %v2600
      %v2602 = vpop.f32.mrf.mxu0
      %2603 = vmatprep.mubr.bf16.mxu0 0
      %2604 = vmatmul.mubr.bf16.gmra.mxu0 %v2530
      %v2605 = vpop.f32.mrf.mxu0
      %v2606 = vadd.f32 0.0, %v2605
      %v2607 = vpop.f32.mrf.mxu0
      %v2608 = vpop.f32.mrf.mxu0
      %v2609 = vadd.f32 0.0, %v2608
      %v2610 = vpop.f32.mrf.mxu0
      %2611 = vmatprep.mubr.bf16.mxu0 0
      %2612 = vmatmul.mubr.bf16.gmra.mxu0 %v2533
      %v2613 = vpop.f32.mrf.mxu0
      %v2614 = vadd.f32 0.0, %v2613
      %v2615 = vpop.f32.mrf.mxu0
      %v2616 = vpop.f32.mrf.mxu0
      %v2617 = vadd.f32 0.0, %v2616
      %v2618 = vpop.f32.mrf.mxu0
      %2619 = vmatprep.mubr.bf16.mxu0 0
      %2620 = vmatmul.mubr.bf16.gmra.mxu0 %v2536
      %v2621 = vpop.f32.mrf.mxu0
      %v2622 = vadd.f32 0.0, %v2621
      %v2623 = vpop.f32.mrf.mxu0
      %v2624 = vpop.f32.mrf.mxu0
      %v2625 = vadd.f32 0.0, %v2624
      %v2626 = vpop.f32.mrf.mxu0
      %2627 = vmatprep.mubr.bf16.mxu0 0
      %2628 = vmatmul.mubr.bf16.gmra.mxu0 %v2539
      %v2629 = vpop.f32.mrf.mxu0
      %v2630 = vadd.f32 0.0, %v2629
      %v2631 = vpop.f32.mrf.mxu0
      %v2632 = vpop.f32.mrf.mxu0
      %v2633 = vadd.f32 0.0, %v2632
      %v2634 = vpop.f32.mrf.mxu0
      %2635 = vmatprep.mubr.bf16.mxu0 0
      %2636 = vmatmul.mubr.bf16.gmra.mxu0 %v2542
      %v2637 = vpop.f32.mrf.mxu0
      %v2638 = vadd.f32 0.0, %v2637
      %v2639 = vpop.f32.mrf.mxu0
      %v2640 = vpop.f32.mrf.mxu0
      %v2641 = vadd.f32 0.0, %v2640
      %v2642 = vpop.f32.mrf.mxu0
      %2643 = vdwg.mxu0
      %v2644 = vadd.f32 %v2390, %v2582
      %v2645 = vadd.f32 %v2391, %v2585
      %v2646 = vadd.f32 %v2392, %v2590
      %v2647 = vadd.f32 %v2393, %v2593
      %v2648 = vadd.f32 %v2394, %v2598
      %v2649 = vadd.f32 %v2395, %v2601
      %v2650 = vadd.f32 %v2396, %v2606
      %v2651 = vadd.f32 %v2397, %v2609
      %v2652 = vadd.f32 %v2398, %v2614
      %v2653 = vadd.f32 %v2399, %v2617
      %v2654 = vadd.f32 %v2400, %v2622
      %v2655 = vadd.f32 %v2401, %v2625
      %v2656 = vadd.f32 %v2402, %v2630
      %v2657 = vadd.f32 %v2403, %v2633
      %v2658 = vadd.f32 %v2404, %v2638
      %v2659 = vadd.f32 %v2405, %v2641
      %v2660 = vld [vmem:[%s2] sm:$0x1]
      %v2662 = vlaneseq
      %v2663 = vshrl.u32 %v2662, 7
      %v2664 = vsub.s32 0, %v2663
      %v2665 = vrot.slane %v2660, %v2664
      %v2667 = vadd.f32 %v2644, %v2665
      %v2668 = vadd.f32 %v2645, %v2665
      %v2669 = vadd.f32 %v2646, %v2665
      %v2670 = vadd.f32 %v2647, %v2665
      %v2671 = vadd.f32 %v2648, %v2665
      %v2672 = vadd.f32 %v2649, %v2665
      %v2673 = vadd.f32 %v2650, %v2665
      %v2674 = vadd.f32 %v2651, %v2665
      %v2675 = vadd.f32 %v2652, %v2665
      %v2676 = vadd.f32 %v2653, %v2665
      %v2677 = vadd.f32 %v2654, %v2665
      %v2678 = vadd.f32 %v2655, %v2665
      %v2679 = vadd.f32 %v2656, %v2665
      %v2680 = vadd.f32 %v2657, %v2665
      %v2681 = vadd.f32 %v2658, %v2665
      %v2682 = vadd.f32 %v2659, %v2665
      %v2683 = vmax.f32 %v2667, 0.0
      %v2684 = vmax.f32 %v2668, 0.0
      %v2685 = vmax.f32 %v2669, 0.0
      %v2686 = vmax.f32 %v2670, 0.0
      %v2687 = vmax.f32 %v2671, 0.0
      %v2688 = vmax.f32 %v2672, 0.0
      %v2689 = vmax.f32 %v2673, 0.0
      %v2690 = vmax.f32 %v2674, 0.0
      %v2691 = vmax.f32 %v2675, 0.0
      %v2692 = vmax.f32 %v2676, 0.0
      %v2693 = vmax.f32 %v2677, 0.0
      %v2694 = vmax.f32 %v2678, 0.0
      %v2695 = vmax.f32 %v2679, 0.0
      %v2696 = vmax.f32 %v2680, 0.0
      %v2697 = vmax.f32 %v2681, 0.0
      %v2698 = vmax.f32 %v2682, 0.0
      %2699 = vst [vmem:[%s192] sm:$0xff] %v2683
      %2700 = vst [vmem:[%s192 + $0x8] sm:$0xff] %v2684
      %2701 = vst [vmem:[%s192 + $0x10] sm:$0xff] %v2685
      %2702 = vst [vmem:[%s192 + $0x18] sm:$0xff] %v2686
      %2703 = vst [vmem:[%s192 + $0x20] sm:$0xff] %v2687
      %2704 = vst [vmem:[%s192 + $0x28] sm:$0xff] %v2688
      %2705 = vst [vmem:[%s192 + $0x30] sm:$0xff] %v2689
      %2706 = vst [vmem:[%s192 + $0x38] sm:$0xff] %v2690
      %2707 = vst [vmem:[%s192 + $0x40] sm:$0xff] %v2691
      %2708 = vst [vmem:[%s192 + $0x48] sm:$0xff] %v2692
      %2709 = vst [vmem:[%s192 + $0x50] sm:$0xff] %v2693
      %2710 = vst [vmem:[%s192 + $0x58] sm:$0xff] %v2694
      %2711 = vst [vmem:[%s192 + $0x60] sm:$0xff] %v2695
      %2712 = vst [vmem:[%s192 + $0x68] sm:$0xff] %v2696
      %2713 = vst [vmem:[%s192 + $0x70] sm:$0xff] %v2697
      %2714 = vst [vmem:[%s192 + $0x78] sm:$0xff] %v2698
      %s2715 = smul.u32 16, %s19
      %p2716 = scmp.lt.s32.totalorder %s18, 1
      %s2717 = scalar_select %p2716, %s18, 1
      %p2718 = scmp.lt.s32.totalorder %s2715, 31
      %s2719 = scalar_select %p2718, %s2715, 31
      %s2720 = smul.addr %s2717, 32
      %s2721 = sadd.s32 %s2719, %s2720
      %s2722 = smul.addr %s2721, 8
      %s2723 = scalar_lea.vmem %s3, %s2722
      // Predicated region
      $region33: #{basic_conv2d.1} parent=31 // pred_check
        %p2724 = pneg %p114
      $region34: #{basic_conv2d.1} parent=31 // pred_check_branch
        %2726 = sbr.rel (%p2724) target = $region36
      $region35: #{basic_conv2d.1} parent=31 // pred_region
        %s2727 = smul.u32 16, %s19
      $region36: #{basic_conv2d.1} parent=31 // pred_fallthru
        _
    $region32: #{basic_conv2d.1} parent=5 // pred_fallthru
      _
    %p2728 = scmp.le.s32.totalorder 2, %s9
    // Predicated region
    $region37: #{basic_conv2d.1} parent=5 // pred_check
      %p2729 = pneg %p2728
    $region38: #{basic_conv2d.1} parent=5 // pred_check_branch
      %2731 = sbr.rel (%p2729) target = $region40
    $region39: #{basic_conv2d.1} parent=5 // pred_region
      %s2732 = ssub.s32 %s9, 2
      // Predicated region
      $region41: #{basic_conv2d.1} parent=39 // pred_check
        %p2733 = pneg %p120
      $region42: #{basic_conv2d.1} parent=39 // pred_check_branch
        %2735 = sbr.rel (%p2733) target = $region44
      $region43: #{basic_conv2d.1} parent=39 // pred_region
        %s2736 = smul.u32 16, %s21
        %p2737 = scmp.lt.s32.totalorder %s20, 1
        %s2738 = scalar_select %p2737, %s20, 1
        %p2739 = scmp.lt.s32.totalorder %s2736, 31
        %s2740 = scalar_select %p2739, %s2736, 31
        %s2741 = smul.addr %s2738, 32
        %s2742 = sadd.s32 %s2740, %s2741
        %s2743 = smul.addr %s2742, 8
        %s2744 = scalar_lea.vmem %s3, %s2743
      $region44: #{basic_conv2d.1} parent=39 // pred_fallthru
        _
    $region40: #{basic_conv2d.1} parent=5 // pred_fallthru
      _
  $region6: #{basic_conv2d.1} parent=0 // loop_footer
    %s13 = sadd.s32 1, %s9
  $region7: #{basic_conv2d.1} parent=0 // loop_footer_branch
    %8 = sbr.rel target = $region3
  $region8: #{basic_conv2d.1} parent=0 // loop_exit
    _

</llo_original>
